<compile_context>
chip_gen: v7x
topology: tpu7x:2x2x1
jax: 0.10.0
libtpu: 0.0.40
codegen_flags: <defaults>
</compile_context>

<pallas_src>
import functools
import math

import numpy as np

import jax
import jax.numpy as jnp
from jax import lax
from jax.experimental import pallas as pl
from jax.experimental.pallas import tpu as pltpu


# ---------------------------------------------------------------------------
# Fixed sin/cos time embedding (matches the PyTorch fixed_time_embedding)
# ---------------------------------------------------------------------------
def fixed_time_embedding(pos, d_model):
    position = 48.0 * pos[..., None]                                          # (B, T, 1)
    div_term = jnp.exp(jnp.arange(0, d_model, 2, dtype=jnp.float32)
                       * (-math.log(10.0) / d_model))                         # (E/2,)
    args = position * div_term                                                # (B, T, E/2)
    pe = jnp.stack([jnp.sin(args), jnp.cos(args)], axis=-1)
    return pe.reshape(pos.shape[0], pos.shape[1], d_model)


# ---------------------------------------------------------------------------
# Weight-slab layout (shared by the packer and the kernel)
# ---------------------------------------------------------------------------
def _slab_layout(*, R, E, D, H, B, mid, out_dim):
    def r8(n):
        return ((n + 7) // 8) * 8

    entries = [
        ('A',   R,       E + 1),      # scaled q@Wk with a ones column (mask-validity)
        ('P',   R * B,   B * R),      # batch-major -> time-major row permutation
        ('Pt',  B * R,   R * B),      # time-major -> batch-major
        ('Wg',  D,       6 * H),      # GRU input gates, Wo/bo folded, [fwd rzn | bwd rzn]
        ('bg',  1,       6 * H),
        ('Whh', 2 * H,   6 * H),      # block-diagonal recurrent gates
        ('bhh', 1,       6 * H),
        ('W1',  2 * H,   mid),        # hiddens_to_z0
        ('b1',  1,       mid),
        ('W2',  mid,     out_dim),
        ('b2',  1,       out_dim),
    ]
    off, row = {}, 0
    for name, nr, nc in entries:
        assert nc <= 128, (name, nc)
        off[name] = (row, nr, nc)
        row += r8(nr)
    return off, row


def pack_enc_mtan_params(params, *, input_dim, num_ref_points, embed_time,
                         nhidden, latent_dim, batch_size, mlp_hidden=50):
    """One-time host packing: fold linears, pre-transpose, embed biases, build one slab."""
    E, R, H = embed_time, num_ref_points, nhidden
    D = 2 * input_dim
    B = batch_size
    mid, out_dim = mlp_hidden, 2 * latent_dim
    off, total = _slab_layout(R=R, E=E, D=D, H=H, B=B, mid=mid, out_dim=out_dim)

    p = {k: np.asarray(v, np.float32) for k, v in params.items()}

    # Constant query embedding + projection, Wk folded in; bq/bk cancel in the softmax.
    ref_pts = np.linspace(0.0, 1.0, R, dtype=np.float32)
    qe = np.asarray(fixed_time_embedding(jnp.asarray(ref_pts)[None, :], E))[0]   # (R, E)
    q = qe @ p['Wq'].T + p['bq']
    A = (q @ p['Wk']) / math.sqrt(E)                                             # (R, E)
    A_aug = np.concatenate([A, np.ones((R, 1), np.float32)], axis=1)             # (R, E+1)

    # Row-permutation matrices between batch-major (b*R+t) and time-major (t*B+b).
    P = np.zeros((R * B, B * R), np.float32)
    for t in range(R):
        for b in range(B):
            P[t * B + b, b * R + t] = 1.0
    Pt = np.ascontiguousarray(P.T)

    # GRU input gates with the attention output projection (Wo, bo) folded in.
    Wg_f = p['Wo'].T @ p['Wih_f'].T                                              # (D, 3H)
    Wg_b = p['Wo'].T @ p['Wih_b'].T
    Wg = np.concatenate([Wg_f, Wg_b], axis=1)                                    # (D, 6H)
    bg = np.concatenate([p['Wih_f'] @ p['bo'] + p['bih_f'],
                         p['Wih_b'] @ p['bo'] + p['bih_b']])                      # (6H,)

    # Block-diagonal recurrent weights: one (B,2H)x(2H,6H) matmul per time step.
    Whh = np.zeros((2 * H, 6 * H), np.float32)
    Whh[0:H, 0:3 * H] = p['Whh_f'].T
    Whh[H:2 * H, 3 * H:6 * H] = p['Whh_b'].T
    bhh = np.concatenate([p['bhh_f'], p['bhh_b']])                                # (6H,)

    pieces = {
        'A': A_aug, 'P': P, 'Pt': Pt,
        'Wg': Wg, 'bg': bg[None, :],
        'Whh': Whh, 'bhh': bhh[None, :],
        'W1': p['W1'].T, 'b1': p['b1'][None, :],
        'W2': p['W2'].T, 'b2': p['b2'][None, :],
    }
    slab = np.zeros((total, 128), np.float32)
    for name, arr in pieces.items():
        r0, nr, nc = off[name]
        assert arr.shape == (nr, nc), (name, arr.shape, (nr, nc))
        slab[r0:r0 + nr, 0:nc] = arr
    return jnp.asarray(slab)


# ---------------------------------------------------------------------------
# Fused forward: multiTimeAttention + bidirectional GRU + hiddens_to_z0 MLP
# ---------------------------------------------------------------------------
def enc_mtan_rnn_forward(wslab, x, time_steps, *, input_dim, num_ref_points,
                         embed_time, nhidden, latent_dim, mlp_hidden=50):
    B, T, _ = x.shape
    D = 2 * input_dim
    R, E, H = num_ref_points, embed_time, nhidden
    mid, out_dim = mlp_hidden, 2 * latent_dim
    off, total = _slab_layout(R=R, E=E, D=D, H=H, B=B, mid=mid, out_dim=out_dim)
    assert wslab.shape == (total, 128), (wslab.shape, total)

    mask = jnp.concatenate([x[:, :, input_dim:], x[:, :, input_dim:]], axis=2)   # (B, T, D)
    key_emb = fixed_time_embedding(time_steps, E)                                # (B, T, E)
    # Validity column: -1e9 for positions observed in NO feature.  It rides the score
    # matmul (paired with the ones column of A) and stabilizes the softmax row-max.
    neg = jnp.where(jnp.max(mask, axis=2) > 0.0, 0.0, -1e9).astype(jnp.float32)  # (B, T)
    ke_aug = jnp.concatenate([key_emb, neg[..., None]], axis=-1)                 # (B, T, E+1)

    def kernel(ke_ref, v_ref, m_ref, w_ref, o_ref, hid_scr):
        f32 = jnp.float32

        def wpiece(name):
            r0, nr, nc = off[name]
            return w_ref[r0:r0 + nr, 0:nc]

        A = wpiece('A'); P = wpiece('P'); Pt = wpiece('Pt')
        Wg = wpiece('Wg'); bg = wpiece('bg')
        Whh = wpiece('Whh'); bhh = wpiece('bhh')
        W1 = wpiece('W1'); b1 = wpiece('b1')
        W2 = wpiece('W2'); b2 = wpiece('b2')

        # ---------------- multiTimeAttention ----------------
        # scores (R, B*T), already scaled and mask-validity-stabilized via the aug column.
        ke2 = ke_ref[...].reshape(B * T, E + 1)
        scores = lax.dot_general(A, ke2, (((1,), (1,)), ((), ())),
                                 preferred_element_type=f32)
        v_all = v_ref[...]
        m_all = m_ref[...]
        att_rows = []
        for b in range(B):                                   # B is tiny & static -> unrolled
            s_b = scores[:, b * T:(b + 1) * T]
            e_b = jnp.exp(s_b - jnp.max(s_b, axis=-1, keepdims=True))
            m_b = m_all[b]
            num = jnp.dot(e_b, v_all[b] * m_b, preferred_element_type=f32)       # (R, D)
            den = jnp.dot(e_b, m_b, preferred_element_type=f32)                  # (R, D)
            # fully-masked (ref,feature) -> 0, matching the reference because v==0 there
            att_rows.append(num * pl.reciprocal(jnp.maximum(den, f32(1e-12)), approx=True))
        att_bm = jnp.concatenate(att_rows, axis=0)            # (B*R, D) batch-major

        # ---------------- bidirectional GRU (batched over batch & direction) ---------
        att_tm = jnp.dot(P, att_bm, preferred_element_type=f32)      # (R*B, D) time-major
        gi = jnp.dot(att_tm, Wg, preferred_element_type=f32) + bg    # (R*B, 6H), Wo folded

        h = jnp.zeros((B, 2 * H), f32)                                # [h_fwd | h_bwd]
        for i in range(R):                                            # fully unrolled, R=8
            j = R - 1 - i
            gh = jnp.dot(h, Whh, preferred_element_type=f32) + bhh    # (B, 6H)
            gif = gi[i * B:(i + 1) * B, 0:3 * H]                      # fwd gates @ time i
            gib = gi[j * B:(j + 1) * B, 3 * H:6 * H]                  # bwd gates @ time j
            rz_f = jax.nn.sigmoid(gif[:, 0:2 * H] + gh[:, 0:2 * H])
            rz_b = jax.nn.sigmoid(gib[:, 0:2 * H] + gh[:, 3 * H:5 * H])
            n_f = jnp.tanh(gif[:, 2 * H:3 * H] + rz_f[:, 0:H] * gh[:, 2 * H:3 * H])
            n_b = jnp.tanh(gib[:, 2 * H:3 * H] + rz_b[:, 0:H] * gh[:, 5 * H:6 * H])
            z_f = rz_f[:, H:2 * H]
            z_b = rz_b[:, H:2 * H]
            h_f = (1.0 - z_f) * n_f + z_f * h[:, 0:H]
            h_b = (1.0 - z_b) * n_b + z_b * h[:, H:2 * H]
            # row-block stores into VMEM scratch (time-major), no per-row concatenates
            hid_scr[i * B:(i + 1) * B, 0:H] = h_f
            hid_scr[j * B:(j + 1) * B, H:2 * H] = h_b
            h = jnp.concatenate([h_f, h_b], axis=1)

        # ---------------- hiddens_to_z0 MLP + reorder back to batch-major -------------
        hid = hid_scr[...]                                                        # (R*B, 2H)
        z1 = jnp.maximum(jnp.dot(hid, W1, preferred_element_type=f32) + b1, 0.0)
        out_tm = jnp.dot(z1, W2, preferred_element_type=f32) + b2                 # (R*B, out)
        o_ref[...] = jnp.dot(Pt, out_tm, preferred_element_type=f32)              # (B*R, out)

    def full(shape):
        n = len(shape)
        return pl.BlockSpec(shape, lambda i, _n=n: (0,) * _n)

    out2d = pl.pallas_call(
        kernel,
        out_shape=jax.ShapeDtypeStruct((B * R, out_dim), jnp.float32),
        grid=(1,),
        in_specs=[
            full((B, T, E + 1)),          # augmented key embedding
            full((B, T, D)),              # values (x)
            full((B, T, D)),              # mask
            full((total, 128)),           # single prepacked weight slab
        ],
        out_specs=pl.BlockSpec((B * R, out_dim), lambda i: (0, 0)),
        scratch_shapes=[pltpu.VMEM((R * B, 2 * H), jnp.float32)],
        compiler_params=pltpu.CompilerParams(dimension_semantics=("arbitrary",)),
    )(ke_aug, x, mask, wslab)

    return out2d.reshape(B, R, out_dim)      # rows are batch-major: free metadata reshape


# ---------------------------------------------------------------------------
# Pure-JAX reference (mirrors the PyTorch forward) for a correctness check
# ---------------------------------------------------------------------------
def reference_forward(params, x, time_steps, *, input_dim, num_ref_points,
                      embed_time, nhidden):
    B, T, _ = x.shape
    H = nhidden
    mask = jnp.concatenate([x[:, :, input_dim:], x[:, :, input_dim:]], axis=2)
    key_emb = fixed_time_embedding(time_steps, embed_time)
    ref_pts = jnp.linspace(0.0, 1.0, num_ref_points)
    query_emb = fixed_time_embedding(ref_pts[None, :], embed_time)              # (1, R, E)

    q = query_emb @ params['Wq'].T + params['bq']                               # (1, R, E)
    k = key_emb @ params['Wk'].T + params['bk']                                 # (B, T, E)
    scores = jnp.einsum('re,bte->brt', q[0], k) / math.sqrt(embed_time)
    s = jnp.broadcast_to(scores[..., None], (B, num_ref_points, T, mask.shape[-1]))
    s = jnp.where(mask[:, None, :, :] == 0.0, -1e9, s)
    p = jax.nn.softmax(s, axis=-2)
    att = jnp.sum(p * x[:, None, :, :], axis=-2)                                # (B, R, D)
    att = att @ params['Wo'].T + params['bo']                                   # (B, R, H)

    def gru_dir(xs, Wih, Whh, bih, bhh):
        def step(h, x_t):
            gi = x_t @ Wih.T + bih
            gh = h @ Whh.T + bhh
            r = jax.nn.sigmoid(gi[:, :H] + gh[:, :H])
            z = jax.nn.sigmoid(gi[:, H:2 * H] + gh[:, H:2 * H])
            n = jnp.tanh(gi[:, 2 * H:] + r * gh[:, 2 * H:])
            h_new = (1.0 - z) * n + z * h
            return h_new, h_new
        h0 = jnp.zeros((B, H), jnp.float32)
        _, hs = lax.scan(step, h0, jnp.swapaxes(xs, 0, 1))
        return jnp.swapaxes(hs, 0, 1)

    fwd = gru_dir(att, params['Wih_f'], params['Whh_f'], params['bih_f'], params['bhh_f'])
    bwd = gru_dir(att[:, ::-1], params['Wih_b'], params['Whh_b'],
                  params['bih_b'], params['bhh_b'])[:, ::-1]
    hid = jnp.concatenate([fwd, bwd], axis=-1)
    z1 = jax.nn.relu(hid @ params['W1'].T + params['b1'])
    return z1 @ params['W2'].T + params['b2']


if __name__ == "__main__":
    input_dim = 4
    latent_dim = 8
    num_ref_points = 8
    nhidden = 16
    embed_time = 16
    B, T = 2, 8
    D = 2 * input_dim
    H = nhidden

    key = jax.random.PRNGKey(0)
    keys = jax.random.split(key, 24)

    def init(k, shape, scale=0.1):
        return (scale * jax.random.normal(k, shape)).astype(jnp.float32)

    params = {
        'Wq': init(keys[0], (embed_time, embed_time)),
        'bq': init(keys[1], (embed_time,)),
        'Wk': init(keys[2], (embed_time, embed_time)),
        'bk': init(keys[3], (embed_time,)),
        'Wo': init(keys[4], (nhidden, D)),
        'bo': init(keys[5], (nhidden,)),
        'Wih_f': init(keys[6], (3 * H, H)),
        'Whh_f': init(keys[7], (3 * H, H)),
        'bih_f': init(keys[8], (3 * H,)),
        'bhh_f': init(keys[9], (3 * H,)),
        'Wih_b': init(keys[10], (3 * H, H)),
        'Whh_b': init(keys[11], (3 * H, H)),
        'bih_b': init(keys[12], (3 * H,)),
        'bhh_b': init(keys[13], (3 * H,)),
        'W1': init(keys[14], (50, 2 * H)),
        'b1': init(keys[15], (50,)),
        'W2': init(keys[16], (2 * latent_dim, 50)),
        'b2': init(keys[17], (2 * latent_dim,)),
    }

    data = jax.random.normal(keys[18], (B, T, input_dim), dtype=jnp.float32)
    obs = (jax.random.uniform(keys[19], (B, T, input_dim)) > 0.3).astype(jnp.float32)
    x = jnp.concatenate([data * obs, obs], axis=2)                            # (B, T, 2*input_dim)
    time_steps = jnp.sort(jax.random.uniform(keys[20], (B, T)), axis=1).astype(jnp.float32)

    # One-time host packing of all weights into a single lane-padded slab.
    wslab = pack_enc_mtan_params(params, input_dim=input_dim,
                                 num_ref_points=num_ref_points,
                                 embed_time=embed_time, nhidden=nhidden,
                                 latent_dim=latent_dim, batch_size=B)

    fwd = jax.jit(functools.partial(enc_mtan_rnn_forward,
                                    input_dim=input_dim,
                                    num_ref_points=num_ref_points,
                                    embed_time=embed_time,
                                    nhidden=nhidden,
                                    latent_dim=latent_dim))
    out = jax.block_until_ready(fwd(wslab, x, time_steps))
    assert out.shape == (B, num_ref_points, 2 * latent_dim), out.shape

    ref = reference_forward(params, x, time_steps,
                            input_dim=input_dim,
                            num_ref_points=num_ref_points,
                            embed_time=embed_time,
                            nhidden=nhidden)
    assert jnp.allclose(out, ref, rtol=3e-3, atol=3e-3), (
        "max abs diff %s" % jnp.max(jnp.abs(out - ref)))

    print("KERNEL_OK")
</pallas_src>

<mosaic_0001>
module attributes {stable_mosaic.version = 11 : i64} {
  func.func @kernel(%arg0: i32, %arg1: memref<2x8x17xf32, #tpu.memory_space<vmem>>, %arg2: memref<2x8x8xf32, #tpu.memory_space<vmem>>, %arg3: memref<2x8x8xf32, #tpu.memory_space<vmem>>, %arg4: memref<200x128xf32, #tpu.memory_space<vmem>>, %arg5: memref<16x16xf32, #tpu.memory_space<vmem>>, %arg6: memref<16x32xf32, #tpu.memory_space<vmem>>) attributes {dimension_semantics = [#tpu.dimension_semantics<arbitrary>], iteration_bounds = array<i64: 1>, scalar_prefetch = 0 : i64, scratch_operands = 1 : i64, tpu.core_type = #tpu.core_type<tc>, window_params = [{pipeline_mode = #tpu.pipeline_mode<synchronous>, transform_indices = @transform_0, window_bounds = array<i64: 2, 8, 17>}, {pipeline_mode = #tpu.pipeline_mode<synchronous>, transform_indices = @transform_1, window_bounds = array<i64: 2, 8, 8>}, {pipeline_mode = #tpu.pipeline_mode<synchronous>, transform_indices = @transform_2, window_bounds = array<i64: 2, 8, 8>}, {pipeline_mode = #tpu.pipeline_mode<synchronous>, transform_indices = @transform_3, window_bounds = array<i64: 200, 128>}, {pipeline_mode = #tpu.pipeline_mode<synchronous>, transform_indices = @transform_4, window_bounds = array<i64: 16, 16>}]} {
    %c0 = arith.constant 0 : index
    %c0_0 = arith.constant 0 : index
    %0 = vector.load %arg4[%c0, %c0_0] : memref<200x128xf32, #tpu.memory_space<vmem>>, vector<8x17xf32>
    %c8 = arith.constant 8 : index
    %c0_1 = arith.constant 0 : index
    %1 = vector.load %arg4[%c8, %c0_1] : memref<200x128xf32, #tpu.memory_space<vmem>>, vector<16x16xf32>
    %c24 = arith.constant 24 : index
    %c0_2 = arith.constant 0 : index
    %2 = vector.load %arg4[%c24, %c0_2] : memref<200x128xf32, #tpu.memory_space<vmem>>, vector<16x16xf32>
    %c40 = arith.constant 40 : index
    %c0_3 = arith.constant 0 : index
    %3 = vector.load %arg4[%c40, %c0_3] : memref<200x128xf32, #tpu.memory_space<vmem>>, vector<8x96xf32>
    %c48 = arith.constant 48 : index
    %c0_4 = arith.constant 0 : index
    %4 = vector.load %arg4[%c48, %c0_4] : memref<200x128xf32, #tpu.memory_space<vmem>>, vector<1x96xf32>
    %c56 = arith.constant 56 : index
    %c0_5 = arith.constant 0 : index
    %5 = vector.load %arg4[%c56, %c0_5] : memref<200x128xf32, #tpu.memory_space<vmem>>, vector<32x96xf32>
    %c88 = arith.constant 88 : index
    %c0_6 = arith.constant 0 : index
    %6 = vector.load %arg4[%c88, %c0_6] : memref<200x128xf32, #tpu.memory_space<vmem>>, vector<1x96xf32>
    %c96 = arith.constant 96 : index
    %c0_7 = arith.constant 0 : index
    %7 = vector.load %arg4[%c96, %c0_7] : memref<200x128xf32, #tpu.memory_space<vmem>>, vector<32x50xf32>
    %c128 = arith.constant 128 : index
    %c0_8 = arith.constant 0 : index
    %8 = vector.load %arg4[%c128, %c0_8] : memref<200x128xf32, #tpu.memory_space<vmem>>, vector<1x50xf32>
    %c136 = arith.constant 136 : index
    %c0_9 = arith.constant 0 : index
    %9 = vector.load %arg4[%c136, %c0_9] : memref<200x128xf32, #tpu.memory_space<vmem>>, vector<50x16xf32>
    %c192 = arith.constant 192 : index
    %c0_10 = arith.constant 0 : index
    %10 = vector.load %arg4[%c192, %c0_10] : memref<200x128xf32, #tpu.memory_space<vmem>>, vector<1x16xf32>
    %c0_11 = arith.constant 0 : index
    %c0_12 = arith.constant 0 : index
    %c0_13 = arith.constant 0 : index
    %11 = vector.load %arg1[%c0_11, %c0_12, %c0_13] : memref<2x8x17xf32, #tpu.memory_space<vmem>>, vector<2x8x17xf32>
    %12 = vector.shape_cast %11 : vector<2x8x17xf32> to vector<16x17xf32>
    %cst = arith.constant dense<0.000000e+00> : vector<8x16xf32>
    %13 = tpu.matmul %0, %12, %cst {dimension_numbers = #tpu.dot_dimension_numbers<[1], [1], [0], [0], [0, 0, 1, 0], [], []>} : vector<8x17xf32>, vector<16x17xf32>, vector<8x16xf32> -> vector<8x16xf32>
    %c0_14 = arith.constant 0 : index
    %c0_15 = arith.constant 0 : index
    %c0_16 = arith.constant 0 : index
    %14 = vector.load %arg2[%c0_14, %c0_15, %c0_16] : memref<2x8x8xf32, #tpu.memory_space<vmem>>, vector<2x8x8xf32>
    %c0_17 = arith.constant 0 : index
    %c0_18 = arith.constant 0 : index
    %c0_19 = arith.constant 0 : index
    %15 = vector.load %arg3[%c0_17, %c0_18, %c0_19] : memref<2x8x8xf32, #tpu.memory_space<vmem>>, vector<2x8x8xf32>
    %16 = vector.extract_strided_slice %13 {offsets = [0, 0], sizes = [8, 8], strides = [1, 1]} : vector<8x16xf32> to vector<8x8xf32>
    %cst_20 = arith.constant dense<0xFF800000> : vector<8xf32>
    %17 = vector.multi_reduction <maximumf>, %16, %cst_20 [1] : vector<8x8xf32> to vector<8xf32>
    %18 = vector.shape_cast %17 : vector<8xf32> to vector<8x1xf32>
    %19 = vector.broadcast %18 : vector<8x1xf32> to vector<8x8xf32>
    %20 = arith.subf %16, %19 : vector<8x8xf32>
    %21 = math.exp %20 : vector<8x8xf32>
    %22 = vector.extract_strided_slice %15 {offsets = [0, 0, 0], sizes = [1, 8, 8], strides = [1, 1, 1]} : vector<2x8x8xf32> to vector<1x8x8xf32>
    %23 = vector.shape_cast %22 : vector<1x8x8xf32> to vector<8x8xf32>
    %24 = vector.extract_strided_slice %14 {offsets = [0, 0, 0], sizes = [1, 8, 8], strides = [1, 1, 1]} : vector<2x8x8xf32> to vector<1x8x8xf32>
    %25 = vector.shape_cast %24 : vector<1x8x8xf32> to vector<8x8xf32>
    %26 = arith.mulf %25, %23 : vector<8x8xf32>
    %cst_21 = arith.constant dense<0.000000e+00> : vector<8x8xf32>
    %27 = tpu.matmul %21, %26, %cst_21 {dimension_numbers = #tpu.dot_dimension_numbers<[1], [0], [0], [1], [0, 0, 1, 1], [], []>} : vector<8x8xf32>, vector<8x8xf32>, vector<8x8xf32> -> vector<8x8xf32>
    %cst_22 = arith.constant dense<0.000000e+00> : vector<8x8xf32>
    %28 = tpu.matmul %21, %23, %cst_22 {dimension_numbers = #tpu.dot_dimension_numbers<[1], [0], [0], [1], [0, 0, 1, 1], [], []>} : vector<8x8xf32>, vector<8x8xf32>, vector<8x8xf32> -> vector<8x8xf32>
    %cst_23 = arith.constant 9.99999996E-13 : f32
    %29 = vector.broadcast %cst_23 : f32 to vector<8x8xf32>
    %30 = arith.maximumf %28, %29 : vector<8x8xf32>
    %31 = tpu.reciprocal %30 {approx = true} : vector<8x8xf32> -> vector<8x8xf32>
    %32 = arith.mulf %27, %31 : vector<8x8xf32>
    %33 = vector.extract_strided_slice %13 {offsets = [0, 8], sizes = [8, 8], strides = [1, 1]} : vector<8x16xf32> to vector<8x8xf32>
    %cst_24 = arith.constant dense<0xFF800000> : vector<8xf32>
    %34 = vector.multi_reduction <maximumf>, %33, %cst_24 [1] : vector<8x8xf32> to vector<8xf32>
    %35 = vector.shape_cast %34 : vector<8xf32> to vector<8x1xf32>
    %36 = vector.broadcast %35 : vector<8x1xf32> to vector<8x8xf32>
    %37 = arith.subf %33, %36 : vector<8x8xf32>
    %38 = math.exp %37 : vector<8x8xf32>
    %39 = vector.extract_strided_slice %15 {offsets = [1, 0, 0], sizes = [1, 8, 8], strides = [1, 1, 1]} : vector<2x8x8xf32> to vector<1x8x8xf32>
    %40 = vector.shape_cast %39 : vector<1x8x8xf32> to vector<8x8xf32>
    %41 = vector.extract_strided_slice %14 {offsets = [1, 0, 0], sizes = [1, 8, 8], strides = [1, 1, 1]} : vector<2x8x8xf32> to vector<1x8x8xf32>
    %42 = vector.shape_cast %41 : vector<1x8x8xf32> to vector<8x8xf32>
    %43 = arith.mulf %42, %40 : vector<8x8xf32>
    %cst_25 = arith.constant dense<0.000000e+00> : vector<8x8xf32>
    %44 = tpu.matmul %38, %43, %cst_25 {dimension_numbers = #tpu.dot_dimension_numbers<[1], [0], [0], [1], [0, 0, 1, 1], [], []>} : vector<8x8xf32>, vector<8x8xf32>, vector<8x8xf32> -> vector<8x8xf32>
    %cst_26 = arith.constant dense<0.000000e+00> : vector<8x8xf32>
    %45 = tpu.matmul %38, %40, %cst_26 {dimension_numbers = #tpu.dot_dimension_numbers<[1], [0], [0], [1], [0, 0, 1, 1], [], []>} : vector<8x8xf32>, vector<8x8xf32>, vector<8x8xf32> -> vector<8x8xf32>
    %cst_27 = arith.constant 9.99999996E-13 : f32
    %46 = vector.broadcast %cst_27 : f32 to vector<8x8xf32>
    %47 = arith.maximumf %45, %46 : vector<8x8xf32>
    %48 = tpu.reciprocal %47 {approx = true} : vector<8x8xf32> -> vector<8x8xf32>
    %49 = arith.mulf %44, %48 : vector<8x8xf32>
    %50 = tpu.concatenate %32, %49 in 0 : vector<8x8xf32>, vector<8x8xf32> -> vector<16x8xf32>
    %cst_28 = arith.constant dense<0.000000e+00> : vector<16x8xf32>
    %51 = tpu.matmul %1, %50, %cst_28 {dimension_numbers = #tpu.dot_dimension_numbers<[1], [0], [0], [1], [0, 0, 1, 1], [], []>} : vector<16x16xf32>, vector<16x8xf32>, vector<16x8xf32> -> vector<16x8xf32>
    %cst_29 = arith.constant dense<0.000000e+00> : vector<16x96xf32>
    %52 = tpu.matmul %51, %3, %cst_29 {dimension_numbers = #tpu.dot_dimension_numbers<[1], [0], [0], [1], [0, 0, 1, 1], [], []>} : vector<16x8xf32>, vector<8x96xf32>, vector<16x96xf32> -> vector<16x96xf32>
    %53 = vector.broadcast %4 : vector<1x96xf32> to vector<16x96xf32>
    %54 = arith.addf %52, %53 : vector<16x96xf32>
    %cst_30 = arith.constant 0.000000e+00 : f32
    %55 = vector.broadcast %cst_30 : f32 to vector<2x32xf32>
    %cst_31 = arith.constant dense<0.000000e+00> : vector<2x96xf32>
    %56 = tpu.matmul %55, %5, %cst_31 {dimension_numbers = #tpu.dot_dimension_numbers<[1], [0], [0], [1], [0, 0, 1, 1], [], []>} : vector<2x32xf32>, vector<32x96xf32>, vector<2x96xf32> -> vector<2x96xf32>
    %57 = vector.broadcast %6 : vector<1x96xf32> to vector<2x96xf32>
    %58 = arith.addf %56, %57 : vector<2x96xf32>
    %59 = vector.extract_strided_slice %54 {offsets = [0, 0], sizes = [2, 48], strides = [1, 1]} : vector<16x96xf32> to vector<2x48xf32>
    %60 = vector.extract_strided_slice %54 {offsets = [14, 48], sizes = [2, 48], strides = [1, 1]} : vector<16x96xf32> to vector<2x48xf32>
    %61 = vector.extract_strided_slice %59 {offsets = [0, 0], sizes = [2, 32], strides = [1, 1]} : vector<2x48xf32> to vector<2x32xf32>
    %62 = vector.extract_strided_slice %58 {offsets = [0, 0], sizes = [2, 32], strides = [1, 1]} : vector<2x96xf32> to vector<2x32xf32>
    %63 = arith.addf %61, %62 : vector<2x32xf32>
    %64 = arith.negf %63 : vector<2x32xf32>
    %65 = math.exp %64 : vector<2x32xf32>
    %cst_32 = arith.constant 1.000000e+00 : f32
    %66 = vector.broadcast %cst_32 : f32 to vector<2x32xf32>
    %67 = arith.addf %66, %65 : vector<2x32xf32>
    %68 = arith.divf %66, %67 : vector<2x32xf32>
    %69 = vector.extract_strided_slice %60 {offsets = [0, 0], sizes = [2, 32], strides = [1, 1]} : vector<2x48xf32> to vector<2x32xf32>
    %70 = vector.extract_strided_slice %58 {offsets = [0, 48], sizes = [2, 32], strides = [1, 1]} : vector<2x96xf32> to vector<2x32xf32>
    %71 = arith.addf %69, %70 : vector<2x32xf32>
    %72 = arith.negf %71 : vector<2x32xf32>
    %73 = math.exp %72 : vector<2x32xf32>
    %cst_33 = arith.constant 1.000000e+00 : f32
    %74 = vector.broadcast %cst_33 : f32 to vector<2x32xf32>
    %75 = arith.addf %74, %73 : vector<2x32xf32>
    %76 = arith.divf %74, %75 : vector<2x32xf32>
    %77 = vector.extract_strided_slice %59 {offsets = [0, 32], sizes = [2, 16], strides = [1, 1]} : vector<2x48xf32> to vector<2x16xf32>
    %78 = vector.extract_strided_slice %68 {offsets = [0, 0], sizes = [2, 16], strides = [1, 1]} : vector<2x32xf32> to vector<2x16xf32>
    %79 = vector.extract_strided_slice %58 {offsets = [0, 32], sizes = [2, 16], strides = [1, 1]} : vector<2x96xf32> to vector<2x16xf32>
    %80 = arith.mulf %78, %79 : vector<2x16xf32>
    %81 = arith.addf %77, %80 : vector<2x16xf32>
    %82 = math.tanh %81 : vector<2x16xf32>
    %83 = vector.extract_strided_slice %60 {offsets = [0, 32], sizes = [2, 16], strides = [1, 1]} : vector<2x48xf32> to vector<2x16xf32>
    %84 = vector.extract_strided_slice %76 {offsets = [0, 0], sizes = [2, 16], strides = [1, 1]} : vector<2x32xf32> to vector<2x16xf32>
    %85 = vector.extract_strided_slice %58 {offsets = [0, 80], sizes = [2, 16], strides = [1, 1]} : vector<2x96xf32> to vector<2x16xf32>
    %86 = arith.mulf %84, %85 : vector<2x16xf32>
    %87 = arith.addf %83, %86 : vector<2x16xf32>
    %88 = math.tanh %87 : vector<2x16xf32>
    %89 = vector.extract_strided_slice %68 {offsets = [0, 16], sizes = [2, 16], strides = [1, 1]} : vector<2x32xf32> to vector<2x16xf32>
    %90 = vector.extract_strided_slice %76 {offsets = [0, 16], sizes = [2, 16], strides = [1, 1]} : vector<2x32xf32> to vector<2x16xf32>
    %cst_34 = arith.constant 1.000000e+00 : f32
    %91 = vector.broadcast %cst_34 : f32 to vector<2x16xf32>
    %92 = arith.subf %91, %89 : vector<2x16xf32>
    %93 = arith.mulf %92, %82 : vector<2x16xf32>
    %94 = vector.extract_strided_slice %55 {offsets = [0, 0], sizes = [2, 16], strides = [1, 1]} : vector<2x32xf32> to vector<2x16xf32>
    %95 = arith.mulf %89, %94 : vector<2x16xf32>
    %96 = arith.addf %93, %95 : vector<2x16xf32>
    %cst_35 = arith.constant 1.000000e+00 : f32
    %97 = vector.broadcast %cst_35 : f32 to vector<2x16xf32>
    %98 = arith.subf %97, %90 : vector<2x16xf32>
    %99 = arith.mulf %98, %88 : vector<2x16xf32>
    %100 = vector.extract_strided_slice %55 {offsets = [0, 16], sizes = [2, 16], strides = [1, 1]} : vector<2x32xf32> to vector<2x16xf32>
    %101 = arith.mulf %90, %100 : vector<2x16xf32>
    %102 = arith.addf %99, %101 : vector<2x16xf32>
    %c0_36 = arith.constant 0 : index
    %c0_37 = arith.constant 0 : index
    %103 = vector.load %arg6[%c0_36, %c0_37] : memref<16x32xf32, #tpu.memory_space<vmem>>, vector<2x16xf32>
    tpu.vector_store %arg6[%c0_36, %c0_37], %96 {strides = array<i32>} : memref<16x32xf32, #tpu.memory_space<vmem>>, vector<2x16xf32>,
    %c14 = arith.constant 14 : index
    %c16 = arith.constant 16 : index
    %104 = vector.load %arg6[%c14, %c16] : memref<16x32xf32, #tpu.memory_space<vmem>>, vector<2x16xf32>
    tpu.vector_store %arg6[%c14, %c16], %102 {strides = array<i32>} : memref<16x32xf32, #tpu.memory_space<vmem>>, vector<2x16xf32>,
    %105 = tpu.concatenate %96, %102 in 1 : vector<2x16xf32>, vector<2x16xf32> -> vector<2x32xf32>
    %cst_38 = arith.constant dense<0.000000e+00> : vector<2x96xf32>
    %106 = tpu.matmul %105, %5, %cst_38 {dimension_numbers = #tpu.dot_dimension_numbers<[1], [0], [0], [1], [0, 0, 1, 1], [], []>} : vector<2x32xf32>, vector<32x96xf32>, vector<2x96xf32> -> vector<2x96xf32>
    %107 = vector.broadcast %6 : vector<1x96xf32> to vector<2x96xf32>
    %108 = arith.addf %106, %107 : vector<2x96xf32>
    %109 = vector.extract_strided_slice %54 {offsets = [2, 0], sizes = [2, 48], strides = [1, 1]} : vector<16x96xf32> to vector<2x48xf32>
    %110 = vector.extract_strided_slice %54 {offsets = [12, 48], sizes = [2, 48], strides = [1, 1]} : vector<16x96xf32> to vector<2x48xf32>
    %111 = vector.extract_strided_slice %109 {offsets = [0, 0], sizes = [2, 32], strides = [1, 1]} : vector<2x48xf32> to vector<2x32xf32>
    %112 = vector.extract_strided_slice %108 {offsets = [0, 0], sizes = [2, 32], strides = [1, 1]} : vector<2x96xf32> to vector<2x32xf32>
    %113 = arith.addf %111, %112 : vector<2x32xf32>
    %114 = arith.negf %113 : vector<2x32xf32>
    %115 = math.exp %114 : vector<2x32xf32>
    %cst_39 = arith.constant 1.000000e+00 : f32
    %116 = vector.broadcast %cst_39 : f32 to vector<2x32xf32>
    %117 = arith.addf %116, %115 : vector<2x32xf32>
    %118 = arith.divf %116, %117 : vector<2x32xf32>
    %119 = vector.extract_strided_slice %110 {offsets = [0, 0], sizes = [2, 32], strides = [1, 1]} : vector<2x48xf32> to vector<2x32xf32>
    %120 = vector.extract_strided_slice %108 {offsets = [0, 48], sizes = [2, 32], strides = [1, 1]} : vector<2x96xf32> to vector<2x32xf32>
    %121 = arith.addf %119, %120 : vector<2x32xf32>
    %122 = arith.negf %121 : vector<2x32xf32>
    %123 = math.exp %122 : vector<2x32xf32>
    %cst_40 = arith.constant 1.000000e+00 : f32
    %124 = vector.broadcast %cst_40 : f32 to vector<2x32xf32>
    %125 = arith.addf %124, %123 : vector<2x32xf32>
    %126 = arith.divf %124, %125 : vector<2x32xf32>
    %127 = vector.extract_strided_slice %109 {offsets = [0, 32], sizes = [2, 16], strides = [1, 1]} : vector<2x48xf32> to vector<2x16xf32>
    %128 = vector.extract_strided_slice %118 {offsets = [0, 0], sizes = [2, 16], strides = [1, 1]} : vector<2x32xf32> to vector<2x16xf32>
    %129 = vector.extract_strided_slice %108 {offsets = [0, 32], sizes = [2, 16], strides = [1, 1]} : vector<2x96xf32> to vector<2x16xf32>
    %130 = arith.mulf %128, %129 : vector<2x16xf32>
    %131 = arith.addf %127, %130 : vector<2x16xf32>
    %132 = math.tanh %131 : vector<2x16xf32>
    %133 = vector.extract_strided_slice %110 {offsets = [0, 32], sizes = [2, 16], strides = [1, 1]} : vector<2x48xf32> to vector<2x16xf32>
    %134 = vector.extract_strided_slice %126 {offsets = [0, 0], sizes = [2, 16], strides = [1, 1]} : vector<2x32xf32> to vector<2x16xf32>
    %135 = vector.extract_strided_slice %108 {offsets = [0, 80], sizes = [2, 16], strides = [1, 1]} : vector<2x96xf32> to vector<2x16xf32>
    %136 = arith.mulf %134, %135 : vector<2x16xf32>
    %137 = arith.addf %133, %136 : vector<2x16xf32>
    %138 = math.tanh %137 : vector<2x16xf32>
    %139 = vector.extract_strided_slice %118 {offsets = [0, 16], sizes = [2, 16], strides = [1, 1]} : vector<2x32xf32> to vector<2x16xf32>
    %140 = vector.extract_strided_slice %126 {offsets = [0, 16], sizes = [2, 16], strides = [1, 1]} : vector<2x32xf32> to vector<2x16xf32>
    %cst_41 = arith.constant 1.000000e+00 : f32
    %141 = vector.broadcast %cst_41 : f32 to vector<2x16xf32>
    %142 = arith.subf %141, %139 : vector<2x16xf32>
    %143 = arith.mulf %142, %132 : vector<2x16xf32>
    %144 = vector.extract_strided_slice %105 {offsets = [0, 0], sizes = [2, 16], strides = [1, 1]} : vector<2x32xf32> to vector<2x16xf32>
    %145 = arith.mulf %139, %144 : vector<2x16xf32>
    %146 = arith.addf %143, %145 : vector<2x16xf32>
    %cst_42 = arith.constant 1.000000e+00 : f32
    %147 = vector.broadcast %cst_42 : f32 to vector<2x16xf32>
    %148 = arith.subf %147, %140 : vector<2x16xf32>
    %149 = arith.mulf %148, %138 : vector<2x16xf32>
    %150 = vector.extract_strided_slice %105 {offsets = [0, 16], sizes = [2, 16], strides = [1, 1]} : vector<2x32xf32> to vector<2x16xf32>
    %151 = arith.mulf %140, %150 : vector<2x16xf32>
    %152 = arith.addf %149, %151 : vector<2x16xf32>
    %c2 = arith.constant 2 : index
    %c0_43 = arith.constant 0 : index
    %153 = vector.load %arg6[%c2, %c0_43] : memref<16x32xf32, #tpu.memory_space<vmem>>, vector<2x16xf32>
    tpu.vector_store %arg6[%c2, %c0_43], %146 {strides = array<i32>} : memref<16x32xf32, #tpu.memory_space<vmem>>, vector<2x16xf32>,
    %c12 = arith.constant 12 : index
    %c16_44 = arith.constant 16 : index
    %154 = vector.load %arg6[%c12, %c16_44] : memref<16x32xf32, #tpu.memory_space<vmem>>, vector<2x16xf32>
    tpu.vector_store %arg6[%c12, %c16_44], %152 {strides = array<i32>} : memref<16x32xf32, #tpu.memory_space<vmem>>, vector<2x16xf32>,
    %155 = tpu.concatenate %146, %152 in 1 : vector<2x16xf32>, vector<2x16xf32> -> vector<2x32xf32>
    %cst_45 = arith.constant dense<0.000000e+00> : vector<2x96xf32>
    %156 = tpu.matmul %155, %5, %cst_45 {dimension_numbers = #tpu.dot_dimension_numbers<[1], [0], [0], [1], [0, 0, 1, 1], [], []>} : vector<2x32xf32>, vector<32x96xf32>, vector<2x96xf32> -> vector<2x96xf32>
    %157 = vector.broadcast %6 : vector<1x96xf32> to vector<2x96xf32>
    %158 = arith.addf %156, %157 : vector<2x96xf32>
    %159 = vector.extract_strided_slice %54 {offsets = [4, 0], sizes = [2, 48], strides = [1, 1]} : vector<16x96xf32> to vector<2x48xf32>
    %160 = vector.extract_strided_slice %54 {offsets = [10, 48], sizes = [2, 48], strides = [1, 1]} : vector<16x96xf32> to vector<2x48xf32>
    %161 = vector.extract_strided_slice %159 {offsets = [0, 0], sizes = [2, 32], strides = [1, 1]} : vector<2x48xf32> to vector<2x32xf32>
    %162 = vector.extract_strided_slice %158 {offsets = [0, 0], sizes = [2, 32], strides = [1, 1]} : vector<2x96xf32> to vector<2x32xf32>
    %163 = arith.addf %161, %162 : vector<2x32xf32>
    %164 = arith.negf %163 : vector<2x32xf32>
    %165 = math.exp %164 : vector<2x32xf32>
    %cst_46 = arith.constant 1.000000e+00 : f32
    %166 = vector.broadcast %cst_46 : f32 to vector<2x32xf32>
    %167 = arith.addf %166, %165 : vector<2x32xf32>
    %168 = arith.divf %166, %167 : vector<2x32xf32>
    %169 = vector.extract_strided_slice %160 {offsets = [0, 0], sizes = [2, 32], strides = [1, 1]} : vector<2x48xf32> to vector<2x32xf32>
    %170 = vector.extract_strided_slice %158 {offsets = [0, 48], sizes = [2, 32], strides = [1, 1]} : vector<2x96xf32> to vector<2x32xf32>
    %171 = arith.addf %169, %170 : vector<2x32xf32>
    %172 = arith.negf %171 : vector<2x32xf32>
    %173 = math.exp %172 : vector<2x32xf32>
    %cst_47 = arith.constant 1.000000e+00 : f32
    %174 = vector.broadcast %cst_47 : f32 to vector<2x32xf32>
    %175 = arith.addf %174, %173 : vector<2x32xf32>
    %176 = arith.divf %174, %175 : vector<2x32xf32>
    %177 = vector.extract_strided_slice %159 {offsets = [0, 32], sizes = [2, 16], strides = [1, 1]} : vector<2x48xf32> to vector<2x16xf32>
    %178 = vector.extract_strided_slice %168 {offsets = [0, 0], sizes = [2, 16], strides = [1, 1]} : vector<2x32xf32> to vector<2x16xf32>
    %179 = vector.extract_strided_slice %158 {offsets = [0, 32], sizes = [2, 16], strides = [1, 1]} : vector<2x96xf32> to vector<2x16xf32>
    %180 = arith.mulf %178, %179 : vector<2x16xf32>
    %181 = arith.addf %177, %180 : vector<2x16xf32>
    %182 = math.tanh %181 : vector<2x16xf32>
    %183 = vector.extract_strided_slice %160 {offsets = [0, 32], sizes = [2, 16], strides = [1, 1]} : vector<2x48xf32> to vector<2x16xf32>
    %184 = vector.extract_strided_slice %176 {offsets = [0, 0], sizes = [2, 16], strides = [1, 1]} : vector<2x32xf32> to vector<2x16xf32>
    %185 = vector.extract_strided_slice %158 {offsets = [0, 80], sizes = [2, 16], strides = [1, 1]} : vector<2x96xf32> to vector<2x16xf32>
    %186 = arith.mulf %184, %185 : vector<2x16xf32>
    %187 = arith.addf %183, %186 : vector<2x16xf32>
    %188 = math.tanh %187 : vector<2x16xf32>
    %189 = vector.extract_strided_slice %168 {offsets = [0, 16], sizes = [2, 16], strides = [1, 1]} : vector<2x32xf32> to vector<2x16xf32>
    %190 = vector.extract_strided_slice %176 {offsets = [0, 16], sizes = [2, 16], strides = [1, 1]} : vector<2x32xf32> to vector<2x16xf32>
    %cst_48 = arith.constant 1.000000e+00 : f32
    %191 = vector.broadcast %cst_48 : f32 to vector<2x16xf32>
    %192 = arith.subf %191, %189 : vector<2x16xf32>
    %193 = arith.mulf %192, %182 : vector<2x16xf32>
    %194 = vector.extract_strided_slice %155 {offsets = [0, 0], sizes = [2, 16], strides = [1, 1]} : vector<2x32xf32> to vector<2x16xf32>
    %195 = arith.mulf %189, %194 : vector<2x16xf32>
    %196 = arith.addf %193, %195 : vector<2x16xf32>
    %cst_49 = arith.constant 1.000000e+00 : f32
    %197 = vector.broadcast %cst_49 : f32 to vector<2x16xf32>
    %198 = arith.subf %197, %190 : vector<2x16xf32>
    %199 = arith.mulf %198, %188 : vector<2x16xf32>
    %200 = vector.extract_strided_slice %155 {offsets = [0, 16], sizes = [2, 16], strides = [1, 1]} : vector<2x32xf32> to vector<2x16xf32>
    %201 = arith.mulf %190, %200 : vector<2x16xf32>
    %202 = arith.addf %199, %201 : vector<2x16xf32>
    %c4 = arith.constant 4 : index
    %c0_50 = arith.constant 0 : index
    %203 = vector.load %arg6[%c4, %c0_50] : memref<16x32xf32, #tpu.memory_space<vmem>>, vector<2x16xf32>
    tpu.vector_store %arg6[%c4, %c0_50], %196 {strides = array<i32>} : memref<16x32xf32, #tpu.memory_space<vmem>>, vector<2x16xf32>,
    %c10 = arith.constant 10 : index
    %c16_51 = arith.constant 16 : index
    %204 = vector.load %arg6[%c10, %c16_51] : memref<16x32xf32, #tpu.memory_space<vmem>>, vector<2x16xf32>
    tpu.vector_store %arg6[%c10, %c16_51], %202 {strides = array<i32>} : memref<16x32xf32, #tpu.memory_space<vmem>>, vector<2x16xf32>,
    %205 = tpu.concatenate %196, %202 in 1 : vector<2x16xf32>, vector<2x16xf32> -> vector<2x32xf32>
    %cst_52 = arith.constant dense<0.000000e+00> : vector<2x96xf32>
    %206 = tpu.matmul %205, %5, %cst_52 {dimension_numbers = #tpu.dot_dimension_numbers<[1], [0], [0], [1], [0, 0, 1, 1], [], []>} : vector<2x32xf32>, vector<32x96xf32>, vector<2x96xf32> -> vector<2x96xf32>
    %207 = vector.broadcast %6 : vector<1x96xf32> to vector<2x96xf32>
    %208 = arith.addf %206, %207 : vector<2x96xf32>
    %209 = vector.extract_strided_slice %54 {offsets = [6, 0], sizes = [2, 48], strides = [1, 1]} : vector<16x96xf32> to vector<2x48xf32>
    %210 = vector.extract_strided_slice %54 {offsets = [8, 48], sizes = [2, 48], strides = [1, 1]} : vector<16x96xf32> to vector<2x48xf32>
    %211 = vector.extract_strided_slice %209 {offsets = [0, 0], sizes = [2, 32], strides = [1, 1]} : vector<2x48xf32> to vector<2x32xf32>
    %212 = vector.extract_strided_slice %208 {offsets = [0, 0], sizes = [2, 32], strides = [1, 1]} : vector<2x96xf32> to vector<2x32xf32>
    %213 = arith.addf %211, %212 : vector<2x32xf32>
    %214 = arith.negf %213 : vector<2x32xf32>
    %215 = math.exp %214 : vector<2x32xf32>
    %cst_53 = arith.constant 1.000000e+00 : f32
    %216 = vector.broadcast %cst_53 : f32 to vector<2x32xf32>
    %217 = arith.addf %216, %215 : vector<2x32xf32>
    %218 = arith.divf %216, %217 : vector<2x32xf32>
    %219 = vector.extract_strided_slice %210 {offsets = [0, 0], sizes = [2, 32], strides = [1, 1]} : vector<2x48xf32> to vector<2x32xf32>
    %220 = vector.extract_strided_slice %208 {offsets = [0, 48], sizes = [2, 32], strides = [1, 1]} : vector<2x96xf32> to vector<2x32xf32>
    %221 = arith.addf %219, %220 : vector<2x32xf32>
    %222 = arith.negf %221 : vector<2x32xf32>
    %223 = math.exp %222 : vector<2x32xf32>
    %cst_54 = arith.constant 1.000000e+00 : f32
    %224 = vector.broadcast %cst_54 : f32 to vector<2x32xf32>
    %225 = arith.addf %224, %223 : vector<2x32xf32>
    %226 = arith.divf %224, %225 : vector<2x32xf32>
    %227 = vector.extract_strided_slice %209 {offsets = [0, 32], sizes = [2, 16], strides = [1, 1]} : vector<2x48xf32> to vector<2x16xf32>
    %228 = vector.extract_strided_slice %218 {offsets = [0, 0], sizes = [2, 16], strides = [1, 1]} : vector<2x32xf32> to vector<2x16xf32>
    %229 = vector.extract_strided_slice %208 {offsets = [0, 32], sizes = [2, 16], strides = [1, 1]} : vector<2x96xf32> to vector<2x16xf32>
    %230 = arith.mulf %228, %229 : vector<2x16xf32>
    %231 = arith.addf %227, %230 : vector<2x16xf32>
    %232 = math.tanh %231 : vector<2x16xf32>
    %233 = vector.extract_strided_slice %210 {offsets = [0, 32], sizes = [2, 16], strides = [1, 1]} : vector<2x48xf32> to vector<2x16xf32>
    %234 = vector.extract_strided_slice %226 {offsets = [0, 0], sizes = [2, 16], strides = [1, 1]} : vector<2x32xf32> to vector<2x16xf32>
    %235 = vector.extract_strided_slice %208 {offsets = [0, 80], sizes = [2, 16], strides = [1, 1]} : vector<2x96xf32> to vector<2x16xf32>
    %236 = arith.mulf %234, %235 : vector<2x16xf32>
    %237 = arith.addf %233, %236 : vector<2x16xf32>
    %238 = math.tanh %237 : vector<2x16xf32>
    %239 = vector.extract_strided_slice %218 {offsets = [0, 16], sizes = [2, 16], strides = [1, 1]} : vector<2x32xf32> to vector<2x16xf32>
    %240 = vector.extract_strided_slice %226 {offsets = [0, 16], sizes = [2, 16], strides = [1, 1]} : vector<2x32xf32> to vector<2x16xf32>
    %cst_55 = arith.constant 1.000000e+00 : f32
    %241 = vector.broadcast %cst_55 : f32 to vector<2x16xf32>
    %242 = arith.subf %241, %239 : vector<2x16xf32>
    %243 = arith.mulf %242, %232 : vector<2x16xf32>
    %244 = vector.extract_strided_slice %205 {offsets = [0, 0], sizes = [2, 16], strides = [1, 1]} : vector<2x32xf32> to vector<2x16xf32>
    %245 = arith.mulf %239, %244 : vector<2x16xf32>
    %246 = arith.addf %243, %245 : vector<2x16xf32>
    %cst_56 = arith.constant 1.000000e+00 : f32
    %247 = vector.broadcast %cst_56 : f32 to vector<2x16xf32>
    %248 = arith.subf %247, %240 : vector<2x16xf32>
    %249 = arith.mulf %248, %238 : vector<2x16xf32>
    %250 = vector.extract_strided_slice %205 {offsets = [0, 16], sizes = [2, 16], strides = [1, 1]} : vector<2x32xf32> to vector<2x16xf32>
    %251 = arith.mulf %240, %250 : vector<2x16xf32>
    %252 = arith.addf %249, %251 : vector<2x16xf32>
    %c6 = arith.constant 6 : index
    %c0_57 = arith.constant 0 : index
    %253 = vector.load %arg6[%c6, %c0_57] : memref<16x32xf32, #tpu.memory_space<vmem>>, vector<2x16xf32>
    tpu.vector_store %arg6[%c6, %c0_57], %246 {strides = array<i32>} : memref<16x32xf32, #tpu.memory_space<vmem>>, vector<2x16xf32>,
    %c8_58 = arith.constant 8 : index
    %c16_59 = arith.constant 16 : index
    %254 = vector.load %arg6[%c8_58, %c16_59] : memref<16x32xf32, #tpu.memory_space<vmem>>, vector<2x16xf32>
    tpu.vector_store %arg6[%c8_58, %c16_59], %252 {strides = array<i32>} : memref<16x32xf32, #tpu.memory_space<vmem>>, vector<2x16xf32>,
    %255 = tpu.concatenate %246, %252 in 1 : vector<2x16xf32>, vector<2x16xf32> -> vector<2x32xf32>
    %cst_60 = arith.constant dense<0.000000e+00> : vector<2x96xf32>
    %256 = tpu.matmul %255, %5, %cst_60 {dimension_numbers = #tpu.dot_dimension_numbers<[1], [0], [0], [1], [0, 0, 1, 1], [], []>} : vector<2x32xf32>, vector<32x96xf32>, vector<2x96xf32> -> vector<2x96xf32>
    %257 = vector.broadcast %6 : vector<1x96xf32> to vector<2x96xf32>
    %258 = arith.addf %256, %257 : vector<2x96xf32>
    %259 = vector.extract_strided_slice %54 {offsets = [8, 0], sizes = [2, 48], strides = [1, 1]} : vector<16x96xf32> to vector<2x48xf32>
    %260 = vector.extract_strided_slice %54 {offsets = [6, 48], sizes = [2, 48], strides = [1, 1]} : vector<16x96xf32> to vector<2x48xf32>
    %261 = vector.extract_strided_slice %259 {offsets = [0, 0], sizes = [2, 32], strides = [1, 1]} : vector<2x48xf32> to vector<2x32xf32>
    %262 = vector.extract_strided_slice %258 {offsets = [0, 0], sizes = [2, 32], strides = [1, 1]} : vector<2x96xf32> to vector<2x32xf32>
    %263 = arith.addf %261, %262 : vector<2x32xf32>
    %264 = arith.negf %263 : vector<2x32xf32>
    %265 = math.exp %264 : vector<2x32xf32>
    %cst_61 = arith.constant 1.000000e+00 : f32
    %266 = vector.broadcast %cst_61 : f32 to vector<2x32xf32>
    %267 = arith.addf %266, %265 : vector<2x32xf32>
    %268 = arith.divf %266, %267 : vector<2x32xf32>
    %269 = vector.extract_strided_slice %260 {offsets = [0, 0], sizes = [2, 32], strides = [1, 1]} : vector<2x48xf32> to vector<2x32xf32>
    %270 = vector.extract_strided_slice %258 {offsets = [0, 48], sizes = [2, 32], strides = [1, 1]} : vector<2x96xf32> to vector<2x32xf32>
    %271 = arith.addf %269, %270 : vector<2x32xf32>
    %272 = arith.negf %271 : vector<2x32xf32>
    %273 = math.exp %272 : vector<2x32xf32>
    %cst_62 = arith.constant 1.000000e+00 : f32
    %274 = vector.broadcast %cst_62 : f32 to vector<2x32xf32>
    %275 = arith.addf %274, %273 : vector<2x32xf32>
    %276 = arith.divf %274, %275 : vector<2x32xf32>
    %277 = vector.extract_strided_slice %259 {offsets = [0, 32], sizes = [2, 16], strides = [1, 1]} : vector<2x48xf32> to vector<2x16xf32>
    %278 = vector.extract_strided_slice %268 {offsets = [0, 0], sizes = [2, 16], strides = [1, 1]} : vector<2x32xf32> to vector<2x16xf32>
    %279 = vector.extract_strided_slice %258 {offsets = [0, 32], sizes = [2, 16], strides = [1, 1]} : vector<2x96xf32> to vector<2x16xf32>
    %280 = arith.mulf %278, %279 : vector<2x16xf32>
    %281 = arith.addf %277, %280 : vector<2x16xf32>
    %282 = math.tanh %281 : vector<2x16xf32>
    %283 = vector.extract_strided_slice %260 {offsets = [0, 32], sizes = [2, 16], strides = [1, 1]} : vector<2x48xf32> to vector<2x16xf32>
    %284 = vector.extract_strided_slice %276 {offsets = [0, 0], sizes = [2, 16], strides = [1, 1]} : vector<2x32xf32> to vector<2x16xf32>
    %285 = vector.extract_strided_slice %258 {offsets = [0, 80], sizes = [2, 16], strides = [1, 1]} : vector<2x96xf32> to vector<2x16xf32>
    %286 = arith.mulf %284, %285 : vector<2x16xf32>
    %287 = arith.addf %283, %286 : vector<2x16xf32>
    %288 = math.tanh %287 : vector<2x16xf32>
    %289 = vector.extract_strided_slice %268 {offsets = [0, 16], sizes = [2, 16], strides = [1, 1]} : vector<2x32xf32> to vector<2x16xf32>
    %290 = vector.extract_strided_slice %276 {offsets = [0, 16], sizes = [2, 16], strides = [1, 1]} : vector<2x32xf32> to vector<2x16xf32>
    %cst_63 = arith.constant 1.000000e+00 : f32
    %291 = vector.broadcast %cst_63 : f32 to vector<2x16xf32>
    %292 = arith.subf %291, %289 : vector<2x16xf32>
    %293 = arith.mulf %292, %282 : vector<2x16xf32>
    %294 = vector.extract_strided_slice %255 {offsets = [0, 0], sizes = [2, 16], strides = [1, 1]} : vector<2x32xf32> to vector<2x16xf32>
    %295 = arith.mulf %289, %294 : vector<2x16xf32>
    %296 = arith.addf %293, %295 : vector<2x16xf32>
    %cst_64 = arith.constant 1.000000e+00 : f32
    %297 = vector.broadcast %cst_64 : f32 to vector<2x16xf32>
    %298 = arith.subf %297, %290 : vector<2x16xf32>
    %299 = arith.mulf %298, %288 : vector<2x16xf32>
    %300 = vector.extract_strided_slice %255 {offsets = [0, 16], sizes = [2, 16], strides = [1, 1]} : vector<2x32xf32> to vector<2x16xf32>
    %301 = arith.mulf %290, %300 : vector<2x16xf32>
    %302 = arith.addf %299, %301 : vector<2x16xf32>
    %c8_65 = arith.constant 8 : index
    %c0_66 = arith.constant 0 : index
    %303 = vector.load %arg6[%c8_65, %c0_66] : memref<16x32xf32, #tpu.memory_space<vmem>>, vector<2x16xf32>
    tpu.vector_store %arg6[%c8_65, %c0_66], %296 {strides = array<i32>} : memref<16x32xf32, #tpu.memory_space<vmem>>, vector<2x16xf32>,
    %c6_67 = arith.constant 6 : index
    %c16_68 = arith.constant 16 : index
    %304 = vector.load %arg6[%c6_67, %c16_68] : memref<16x32xf32, #tpu.memory_space<vmem>>, vector<2x16xf32>
    tpu.vector_store %arg6[%c6_67, %c16_68], %302 {strides = array<i32>} : memref<16x32xf32, #tpu.memory_space<vmem>>, vector<2x16xf32>,
    %305 = tpu.concatenate %296, %302 in 1 : vector<2x16xf32>, vector<2x16xf32> -> vector<2x32xf32>
    %cst_69 = arith.constant dense<0.000000e+00> : vector<2x96xf32>
    %306 = tpu.matmul %305, %5, %cst_69 {dimension_numbers = #tpu.dot_dimension_numbers<[1], [0], [0], [1], [0, 0, 1, 1], [], []>} : vector<2x32xf32>, vector<32x96xf32>, vector<2x96xf32> -> vector<2x96xf32>
    %307 = vector.broadcast %6 : vector<1x96xf32> to vector<2x96xf32>
    %308 = arith.addf %306, %307 : vector<2x96xf32>
    %309 = vector.extract_strided_slice %54 {offsets = [10, 0], sizes = [2, 48], strides = [1, 1]} : vector<16x96xf32> to vector<2x48xf32>
    %310 = vector.extract_strided_slice %54 {offsets = [4, 48], sizes = [2, 48], strides = [1, 1]} : vector<16x96xf32> to vector<2x48xf32>
    %311 = vector.extract_strided_slice %309 {offsets = [0, 0], sizes = [2, 32], strides = [1, 1]} : vector<2x48xf32> to vector<2x32xf32>
    %312 = vector.extract_strided_slice %308 {offsets = [0, 0], sizes = [2, 32], strides = [1, 1]} : vector<2x96xf32> to vector<2x32xf32>
    %313 = arith.addf %311, %312 : vector<2x32xf32>
    %314 = arith.negf %313 : vector<2x32xf32>
    %315 = math.exp %314 : vector<2x32xf32>
    %cst_70 = arith.constant 1.000000e+00 : f32
    %316 = vector.broadcast %cst_70 : f32 to vector<2x32xf32>
    %317 = arith.addf %316, %315 : vector<2x32xf32>
    %318 = arith.divf %316, %317 : vector<2x32xf32>
    %319 = vector.extract_strided_slice %310 {offsets = [0, 0], sizes = [2, 32], strides = [1, 1]} : vector<2x48xf32> to vector<2x32xf32>
    %320 = vector.extract_strided_slice %308 {offsets = [0, 48], sizes = [2, 32], strides = [1, 1]} : vector<2x96xf32> to vector<2x32xf32>
    %321 = arith.addf %319, %320 : vector<2x32xf32>
    %322 = arith.negf %321 : vector<2x32xf32>
    %323 = math.exp %322 : vector<2x32xf32>
    %cst_71 = arith.constant 1.000000e+00 : f32
    %324 = vector.broadcast %cst_71 : f32 to vector<2x32xf32>
    %325 = arith.addf %324, %323 : vector<2x32xf32>
    %326 = arith.divf %324, %325 : vector<2x32xf32>
    %327 = vector.extract_strided_slice %309 {offsets = [0, 32], sizes = [2, 16], strides = [1, 1]} : vector<2x48xf32> to vector<2x16xf32>
    %328 = vector.extract_strided_slice %318 {offsets = [0, 0], sizes = [2, 16], strides = [1, 1]} : vector<2x32xf32> to vector<2x16xf32>
    %329 = vector.extract_strided_slice %308 {offsets = [0, 32], sizes = [2, 16], strides = [1, 1]} : vector<2x96xf32> to vector<2x16xf32>
    %330 = arith.mulf %328, %329 : vector<2x16xf32>
    %331 = arith.addf %327, %330 : vector<2x16xf32>
    %332 = math.tanh %331 : vector<2x16xf32>
    %333 = vector.extract_strided_slice %310 {offsets = [0, 32], sizes = [2, 16], strides = [1, 1]} : vector<2x48xf32> to vector<2x16xf32>
    %334 = vector.extract_strided_slice %326 {offsets = [0, 0], sizes = [2, 16], strides = [1, 1]} : vector<2x32xf32> to vector<2x16xf32>
    %335 = vector.extract_strided_slice %308 {offsets = [0, 80], sizes = [2, 16], strides = [1, 1]} : vector<2x96xf32> to vector<2x16xf32>
    %336 = arith.mulf %334, %335 : vector<2x16xf32>
    %337 = arith.addf %333, %336 : vector<2x16xf32>
    %338 = math.tanh %337 : vector<2x16xf32>
    %339 = vector.extract_strided_slice %318 {offsets = [0, 16], sizes = [2, 16], strides = [1, 1]} : vector<2x32xf32> to vector<2x16xf32>
    %340 = vector.extract_strided_slice %326 {offsets = [0, 16], sizes = [2, 16], strides = [1, 1]} : vector<2x32xf32> to vector<2x16xf32>
    %cst_72 = arith.constant 1.000000e+00 : f32
    %341 = vector.broadcast %cst_72 : f32 to vector<2x16xf32>
    %342 = arith.subf %341, %339 : vector<2x16xf32>
    %343 = arith.mulf %342, %332 : vector<2x16xf32>
    %344 = vector.extract_strided_slice %305 {offsets = [0, 0], sizes = [2, 16], strides = [1, 1]} : vector<2x32xf32> to vector<2x16xf32>
    %345 = arith.mulf %339, %344 : vector<2x16xf32>
    %346 = arith.addf %343, %345 : vector<2x16xf32>
    %cst_73 = arith.constant 1.000000e+00 : f32
    %347 = vector.broadcast %cst_73 : f32 to vector<2x16xf32>
    %348 = arith.subf %347, %340 : vector<2x16xf32>
    %349 = arith.mulf %348, %338 : vector<2x16xf32>
    %350 = vector.extract_strided_slice %305 {offsets = [0, 16], sizes = [2, 16], strides = [1, 1]} : vector<2x32xf32> to vector<2x16xf32>
    %351 = arith.mulf %340, %350 : vector<2x16xf32>
    %352 = arith.addf %349, %351 : vector<2x16xf32>
    %c10_74 = arith.constant 10 : index
    %c0_75 = arith.constant 0 : index
    %353 = vector.load %arg6[%c10_74, %c0_75] : memref<16x32xf32, #tpu.memory_space<vmem>>, vector<2x16xf32>
    tpu.vector_store %arg6[%c10_74, %c0_75], %346 {strides = array<i32>} : memref<16x32xf32, #tpu.memory_space<vmem>>, vector<2x16xf32>,
    %c4_76 = arith.constant 4 : index
    %c16_77 = arith.constant 16 : index
    %354 = vector.load %arg6[%c4_76, %c16_77] : memref<16x32xf32, #tpu.memory_space<vmem>>, vector<2x16xf32>
    tpu.vector_store %arg6[%c4_76, %c16_77], %352 {strides = array<i32>} : memref<16x32xf32, #tpu.memory_space<vmem>>, vector<2x16xf32>,
    %355 = tpu.concatenate %346, %352 in 1 : vector<2x16xf32>, vector<2x16xf32> -> vector<2x32xf32>
    %cst_78 = arith.constant dense<0.000000e+00> : vector<2x96xf32>
    %356 = tpu.matmul %355, %5, %cst_78 {dimension_numbers = #tpu.dot_dimension_numbers<[1], [0], [0], [1], [0, 0, 1, 1], [], []>} : vector<2x32xf32>, vector<32x96xf32>, vector<2x96xf32> -> vector<2x96xf32>
    %357 = vector.broadcast %6 : vector<1x96xf32> to vector<2x96xf32>
    %358 = arith.addf %356, %357 : vector<2x96xf32>
    %359 = vector.extract_strided_slice %54 {offsets = [12, 0], sizes = [2, 48], strides = [1, 1]} : vector<16x96xf32> to vector<2x48xf32>
    %360 = vector.extract_strided_slice %54 {offsets = [2, 48], sizes = [2, 48], strides = [1, 1]} : vector<16x96xf32> to vector<2x48xf32>
    %361 = vector.extract_strided_slice %359 {offsets = [0, 0], sizes = [2, 32], strides = [1, 1]} : vector<2x48xf32> to vector<2x32xf32>
    %362 = vector.extract_strided_slice %358 {offsets = [0, 0], sizes = [2, 32], strides = [1, 1]} : vector<2x96xf32> to vector<2x32xf32>
    %363 = arith.addf %361, %362 : vector<2x32xf32>
    %364 = arith.negf %363 : vector<2x32xf32>
    %365 = math.exp %364 : vector<2x32xf32>
    %cst_79 = arith.constant 1.000000e+00 : f32
    %366 = vector.broadcast %cst_79 : f32 to vector<2x32xf32>
    %367 = arith.addf %366, %365 : vector<2x32xf32>
    %368 = arith.divf %366, %367 : vector<2x32xf32>
    %369 = vector.extract_strided_slice %360 {offsets = [0, 0], sizes = [2, 32], strides = [1, 1]} : vector<2x48xf32> to vector<2x32xf32>
    %370 = vector.extract_strided_slice %358 {offsets = [0, 48], sizes = [2, 32], strides = [1, 1]} : vector<2x96xf32> to vector<2x32xf32>
    %371 = arith.addf %369, %370 : vector<2x32xf32>
    %372 = arith.negf %371 : vector<2x32xf32>
    %373 = math.exp %372 : vector<2x32xf32>
    %cst_80 = arith.constant 1.000000e+00 : f32
    %374 = vector.broadcast %cst_80 : f32 to vector<2x32xf32>
    %375 = arith.addf %374, %373 : vector<2x32xf32>
    %376 = arith.divf %374, %375 : vector<2x32xf32>
    %377 = vector.extract_strided_slice %359 {offsets = [0, 32], sizes = [2, 16], strides = [1, 1]} : vector<2x48xf32> to vector<2x16xf32>
    %378 = vector.extract_strided_slice %368 {offsets = [0, 0], sizes = [2, 16], strides = [1, 1]} : vector<2x32xf32> to vector<2x16xf32>
    %379 = vector.extract_strided_slice %358 {offsets = [0, 32], sizes = [2, 16], strides = [1, 1]} : vector<2x96xf32> to vector<2x16xf32>
    %380 = arith.mulf %378, %379 : vector<2x16xf32>
    %381 = arith.addf %377, %380 : vector<2x16xf32>
    %382 = math.tanh %381 : vector<2x16xf32>
    %383 = vector.extract_strided_slice %360 {offsets = [0, 32], sizes = [2, 16], strides = [1, 1]} : vector<2x48xf32> to vector<2x16xf32>
    %384 = vector.extract_strided_slice %376 {offsets = [0, 0], sizes = [2, 16], strides = [1, 1]} : vector<2x32xf32> to vector<2x16xf32>
    %385 = vector.extract_strided_slice %358 {offsets = [0, 80], sizes = [2, 16], strides = [1, 1]} : vector<2x96xf32> to vector<2x16xf32>
    %386 = arith.mulf %384, %385 : vector<2x16xf32>
    %387 = arith.addf %383, %386 : vector<2x16xf32>
    %388 = math.tanh %387 : vector<2x16xf32>
    %389 = vector.extract_strided_slice %368 {offsets = [0, 16], sizes = [2, 16], strides = [1, 1]} : vector<2x32xf32> to vector<2x16xf32>
    %390 = vector.extract_strided_slice %376 {offsets = [0, 16], sizes = [2, 16], strides = [1, 1]} : vector<2x32xf32> to vector<2x16xf32>
    %cst_81 = arith.constant 1.000000e+00 : f32
    %391 = vector.broadcast %cst_81 : f32 to vector<2x16xf32>
    %392 = arith.subf %391, %389 : vector<2x16xf32>
    %393 = arith.mulf %392, %382 : vector<2x16xf32>
    %394 = vector.extract_strided_slice %355 {offsets = [0, 0], sizes = [2, 16], strides = [1, 1]} : vector<2x32xf32> to vector<2x16xf32>
    %395 = arith.mulf %389, %394 : vector<2x16xf32>
    %396 = arith.addf %393, %395 : vector<2x16xf32>
    %cst_82 = arith.constant 1.000000e+00 : f32
    %397 = vector.broadcast %cst_82 : f32 to vector<2x16xf32>
    %398 = arith.subf %397, %390 : vector<2x16xf32>
    %399 = arith.mulf %398, %388 : vector<2x16xf32>
    %400 = vector.extract_strided_slice %355 {offsets = [0, 16], sizes = [2, 16], strides = [1, 1]} : vector<2x32xf32> to vector<2x16xf32>
    %401 = arith.mulf %390, %400 : vector<2x16xf32>
    %402 = arith.addf %399, %401 : vector<2x16xf32>
    %c12_83 = arith.constant 12 : index
    %c0_84 = arith.constant 0 : index
    %403 = vector.load %arg6[%c12_83, %c0_84] : memref<16x32xf32, #tpu.memory_space<vmem>>, vector<2x16xf32>
    tpu.vector_store %arg6[%c12_83, %c0_84], %396 {strides = array<i32>} : memref<16x32xf32, #tpu.memory_space<vmem>>, vector<2x16xf32>,
    %c2_85 = arith.constant 2 : index
    %c16_86 = arith.constant 16 : index
    %404 = vector.load %arg6[%c2_85, %c16_86] : memref<16x32xf32, #tpu.memory_space<vmem>>, vector<2x16xf32>
    tpu.vector_store %arg6[%c2_85, %c16_86], %402 {strides = array<i32>} : memref<16x32xf32, #tpu.memory_space<vmem>>, vector<2x16xf32>,
    %405 = tpu.concatenate %396, %402 in 1 : vector<2x16xf32>, vector<2x16xf32> -> vector<2x32xf32>
    %cst_87 = arith.constant dense<0.000000e+00> : vector<2x96xf32>
    %406 = tpu.matmul %405, %5, %cst_87 {dimension_numbers = #tpu.dot_dimension_numbers<[1], [0], [0], [1], [0, 0, 1, 1], [], []>} : vector<2x32xf32>, vector<32x96xf32>, vector<2x96xf32> -> vector<2x96xf32>
    %407 = vector.broadcast %6 : vector<1x96xf32> to vector<2x96xf32>
    %408 = arith.addf %406, %407 : vector<2x96xf32>
    %409 = vector.extract_strided_slice %54 {offsets = [14, 0], sizes = [2, 48], strides = [1, 1]} : vector<16x96xf32> to vector<2x48xf32>
    %410 = vector.extract_strided_slice %54 {offsets = [0, 48], sizes = [2, 48], strides = [1, 1]} : vector<16x96xf32> to vector<2x48xf32>
    %411 = vector.extract_strided_slice %409 {offsets = [0, 0], sizes = [2, 32], strides = [1, 1]} : vector<2x48xf32> to vector<2x32xf32>
    %412 = vector.extract_strided_slice %408 {offsets = [0, 0], sizes = [2, 32], strides = [1, 1]} : vector<2x96xf32> to vector<2x32xf32>
    %413 = arith.addf %411, %412 : vector<2x32xf32>
    %414 = arith.negf %413 : vector<2x32xf32>
    %415 = math.exp %414 : vector<2x32xf32>
    %cst_88 = arith.constant 1.000000e+00 : f32
    %416 = vector.broadcast %cst_88 : f32 to vector<2x32xf32>
    %417 = arith.addf %416, %415 : vector<2x32xf32>
    %418 = arith.divf %416, %417 : vector<2x32xf32>
    %419 = vector.extract_strided_slice %410 {offsets = [0, 0], sizes = [2, 32], strides = [1, 1]} : vector<2x48xf32> to vector<2x32xf32>
    %420 = vector.extract_strided_slice %408 {offsets = [0, 48], sizes = [2, 32], strides = [1, 1]} : vector<2x96xf32> to vector<2x32xf32>
    %421 = arith.addf %419, %420 : vector<2x32xf32>
    %422 = arith.negf %421 : vector<2x32xf32>
    %423 = math.exp %422 : vector<2x32xf32>
    %cst_89 = arith.constant 1.000000e+00 : f32
    %424 = vector.broadcast %cst_89 : f32 to vector<2x32xf32>
    %425 = arith.addf %424, %423 : vector<2x32xf32>
    %426 = arith.divf %424, %425 : vector<2x32xf32>
    %427 = vector.extract_strided_slice %409 {offsets = [0, 32], sizes = [2, 16], strides = [1, 1]} : vector<2x48xf32> to vector<2x16xf32>
    %428 = vector.extract_strided_slice %418 {offsets = [0, 0], sizes = [2, 16], strides = [1, 1]} : vector<2x32xf32> to vector<2x16xf32>
    %429 = vector.extract_strided_slice %408 {offsets = [0, 32], sizes = [2, 16], strides = [1, 1]} : vector<2x96xf32> to vector<2x16xf32>
    %430 = arith.mulf %428, %429 : vector<2x16xf32>
    %431 = arith.addf %427, %430 : vector<2x16xf32>
    %432 = math.tanh %431 : vector<2x16xf32>
    %433 = vector.extract_strided_slice %410 {offsets = [0, 32], sizes = [2, 16], strides = [1, 1]} : vector<2x48xf32> to vector<2x16xf32>
    %434 = vector.extract_strided_slice %426 {offsets = [0, 0], sizes = [2, 16], strides = [1, 1]} : vector<2x32xf32> to vector<2x16xf32>
    %435 = vector.extract_strided_slice %408 {offsets = [0, 80], sizes = [2, 16], strides = [1, 1]} : vector<2x96xf32> to vector<2x16xf32>
    %436 = arith.mulf %434, %435 : vector<2x16xf32>
    %437 = arith.addf %433, %436 : vector<2x16xf32>
    %438 = math.tanh %437 : vector<2x16xf32>
    %439 = vector.extract_strided_slice %418 {offsets = [0, 16], sizes = [2, 16], strides = [1, 1]} : vector<2x32xf32> to vector<2x16xf32>
    %440 = vector.extract_strided_slice %426 {offsets = [0, 16], sizes = [2, 16], strides = [1, 1]} : vector<2x32xf32> to vector<2x16xf32>
    %cst_90 = arith.constant 1.000000e+00 : f32
    %441 = vector.broadcast %cst_90 : f32 to vector<2x16xf32>
    %442 = arith.subf %441, %439 : vector<2x16xf32>
    %443 = arith.mulf %442, %432 : vector<2x16xf32>
    %444 = vector.extract_strided_slice %405 {offsets = [0, 0], sizes = [2, 16], strides = [1, 1]} : vector<2x32xf32> to vector<2x16xf32>
    %445 = arith.mulf %439, %444 : vector<2x16xf32>
    %446 = arith.addf %443, %445 : vector<2x16xf32>
    %cst_91 = arith.constant 1.000000e+00 : f32
    %447 = vector.broadcast %cst_91 : f32 to vector<2x16xf32>
    %448 = arith.subf %447, %440 : vector<2x16xf32>
    %449 = arith.mulf %448, %438 : vector<2x16xf32>
    %450 = vector.extract_strided_slice %405 {offsets = [0, 16], sizes = [2, 16], strides = [1, 1]} : vector<2x32xf32> to vector<2x16xf32>
    %451 = arith.mulf %440, %450 : vector<2x16xf32>
    %452 = arith.addf %449, %451 : vector<2x16xf32>
    %c14_92 = arith.constant 14 : index
    %c0_93 = arith.constant 0 : index
    %453 = vector.load %arg6[%c14_92, %c0_93] : memref<16x32xf32, #tpu.memory_space<vmem>>, vector<2x16xf32>
    tpu.vector_store %arg6[%c14_92, %c0_93], %446 {strides = array<i32>} : memref<16x32xf32, #tpu.memory_space<vmem>>, vector<2x16xf32>,
    %c0_94 = arith.constant 0 : index
    %c16_95 = arith.constant 16 : index
    %454 = vector.load %arg6[%c0_94, %c16_95] : memref<16x32xf32, #tpu.memory_space<vmem>>, vector<2x16xf32>
    tpu.vector_store %arg6[%c0_94, %c16_95], %452 {strides = array<i32>} : memref<16x32xf32, #tpu.memory_space<vmem>>, vector<2x16xf32>,
    %c0_96 = arith.constant 0 : index
    %c0_97 = arith.constant 0 : index
    %455 = vector.load %arg6[%c0_96, %c0_97] : memref<16x32xf32, #tpu.memory_space<vmem>>, vector<16x32xf32>
    %cst_98 = arith.constant dense<0.000000e+00> : vector<16x50xf32>
    %456 = tpu.matmul %455, %7, %cst_98 {dimension_numbers = #tpu.dot_dimension_numbers<[1], [0], [0], [1], [0, 0, 1, 1], [], []>} : vector<16x32xf32>, vector<32x50xf32>, vector<16x50xf32> -> vector<16x50xf32>
    %457 = vector.broadcast %8 : vector<1x50xf32> to vector<16x50xf32>
    %458 = arith.addf %456, %457 : vector<16x50xf32>
    %cst_99 = arith.constant 0.000000e+00 : f32
    %459 = vector.broadcast %cst_99 : f32 to vector<16x50xf32>
    %460 = arith.maximumf %458, %459 : vector<16x50xf32>
    %cst_100 = arith.constant dense<0.000000e+00> : vector<16x16xf32>
    %461 = tpu.matmul %460, %9, %cst_100 {dimension_numbers = #tpu.dot_dimension_numbers<[1], [0], [0], [1], [0, 0, 1, 1], [], []>} : vector<16x50xf32>, vector<50x16xf32>, vector<16x16xf32> -> vector<16x16xf32>
    %462 = vector.broadcast %10 : vector<1x16xf32> to vector<16x16xf32>
    %463 = arith.addf %461, %462 : vector<16x16xf32>
    %cst_101 = arith.constant dense<0.000000e+00> : vector<16x16xf32>
    %464 = tpu.matmul %2, %463, %cst_101 {dimension_numbers = #tpu.dot_dimension_numbers<[1], [0], [0], [1], [0, 0, 1, 1], [], []>} : vector<16x16xf32>, vector<16x16xf32>, vector<16x16xf32> -> vector<16x16xf32>
    %c0_102 = arith.constant 0 : index
    %c0_103 = arith.constant 0 : index
    %465 = vector.load %arg5[%c0_102, %c0_103] : memref<16x16xf32, #tpu.memory_space<vmem>>, vector<16x16xf32>
    tpu.vector_store %arg5[%c0_102, %c0_103], %464 {strides = array<i32>} : memref<16x16xf32, #tpu.memory_space<vmem>>, vector<16x16xf32>,
    return
  }
  func.func @transform_0(%arg0: i32) -> (i32, i32, i32) {
    %c0_i32 = arith.constant 0 : i32
    %c0_i32_0 = arith.constant 0 : i32
    %c0_i32_1 = arith.constant 0 : i32
    %c0_i32_2 = arith.constant 0 : i32
    return %c0_i32, %c0_i32_0, %c0_i32_1 : i32, i32, i32
  }
  func.func @transform_1(%arg0: i32) -> (i32, i32, i32) {
    %c0_i32 = arith.constant 0 : i32
    %c0_i32_0 = arith.constant 0 : i32
    %c0_i32_1 = arith.constant 0 : i32
    %c0_i32_2 = arith.constant 0 : i32
    return %c0_i32, %c0_i32_0, %c0_i32_1 : i32, i32, i32
  }
  func.func @transform_2(%arg0: i32) -> (i32, i32, i32) {
    %c0_i32 = arith.constant 0 : i32
    %c0_i32_0 = arith.constant 0 : i32
    %c0_i32_1 = arith.constant 0 : i32
    %c0_i32_2 = arith.constant 0 : i32
    return %c0_i32, %c0_i32_0, %c0_i32_1 : i32, i32, i32
  }
  func.func @transform_3(%arg0: i32) -> (i32, i32) {
    %c0_i32 = arith.constant 0 : i32
    %c0_i32_0 = arith.constant 0 : i32
    %c0_i32_1 = arith.constant 0 : i32
    return %c0_i32, %c0_i32_0 : i32, i32
  }
  func.func @transform_4(%arg0: i32) -> (i32, i32) {
    %c0_i32 = arith.constant 0 : i32
    %c0_i32_0 = arith.constant 0 : i32
    %c0_i32_1 = arith.constant 0 : i32
    return %c0_i32, %c0_i32_0 : i32, i32
  }
}

</mosaic_0001>

<llo_original>
// kernel: enc_mtan_rnn_forward.1
$region0: #{enc_mtan_rnn_forward.1}
  #allocation0 [shape = 'u32[]', space=smem, size = 0x4, offset = 0x4, fixed_abs, tag = 'smem constant byte address 0x4 - core index']
  #allocation1 [shape = 'u32[144,128]{1,0:T(1,128)}', space=vmem, size = 0x12000, scoped, tag = 'internal scratch']
  #allocation2 [shape = 'f32[16,32]{1,0:T(8,128)}', space=vmem, size = 0x2000, scoped, tag = 'scratch operand']
  %s0 = inlined_call_operand.vmem [shape: f32[2,8,17], index: 0, kind: input, shape index: {}]
  %s1 = inlined_call_operand.vmem [shape: f32[2,8,8], index: 1, kind: input, shape index: {}]
  %s2 = inlined_call_operand.vmem [shape: f32[2,8,8], index: 2, kind: input, shape index: {}]
  %s3 = inlined_call_operand.vmem [shape: f32[200,128], index: 3, kind: input, shape index: {}]
  %s4 = inlined_call_operand.hbm [shape: f32[16,16], index: 4, kind: output, shape index: {}]
  %s5 = sld [smem:[#allocation0]]
  $region26: #{enc_mtan_rnn_forward.1} parent=0
    _
  %s7 = ssub.s32 1, %s5
  %s8 = scalar_select 0, %s7, %s5
  $region1: #{enc_mtan_rnn_forward.1} parent=0
    #allocation3 [shape = 'u8[8192]{0}', space=vmem, size = 0x2000, scoped, tag = 'output window, operand 0, single buffered']
    #allocation4 [shape = 's32[1]{0}', space=sflag, size = 0x4, scoped, tag = 'scoped memory for enc_mtan_rnn_forward.1']
    %9 = vsyncpa [#allocation4], 0
    // Predicated region
    $region2: #{enc_mtan_rnn_forward.1} parent=1 // pred_check
      _
    $region3: #{enc_mtan_rnn_forward.1} parent=1 // pred_check_branch
      %11 = sbr.rel (0) target = $region5
    $region4: #{enc_mtan_rnn_forward.1} parent=1 // pred_region
      _
    $region5: #{enc_mtan_rnn_forward.1} parent=1 // pred_fallthru
      _
    // Predicated region
    $region6: #{enc_mtan_rnn_forward.1} parent=1 // pred_check
      _
    $region7: #{enc_mtan_rnn_forward.1} parent=1 // pred_check_branch
      %13 = sbr.rel (0) target = $region9
    $region8: #{enc_mtan_rnn_forward.1} parent=1 // pred_region
      _
    $region9: #{enc_mtan_rnn_forward.1} parent=1 // pred_fallthru
      _
    // Predicated region
    $region10: #{enc_mtan_rnn_forward.1} parent=1 // pred_check
      _
    $region11: #{enc_mtan_rnn_forward.1} parent=1 // pred_check_branch
      %15 = sbr.rel (0) target = $region13
    $region12: #{enc_mtan_rnn_forward.1} parent=1 // pred_region
      _
    $region13: #{enc_mtan_rnn_forward.1} parent=1 // pred_fallthru
      _
    // Predicated region
    $region14: #{enc_mtan_rnn_forward.1} parent=1 // pred_check
      _
    $region15: #{enc_mtan_rnn_forward.1} parent=1 // pred_check_branch
      %17 = sbr.rel (0) target = $region17
    $region16: #{enc_mtan_rnn_forward.1} parent=1 // pred_region
      _
    $region17: #{enc_mtan_rnn_forward.1} parent=1 // pred_fallthru
      _
    %v18 = vld [vmem:[%s3] sm:$0xff]
    %v19 = vld [vmem:[%s3 + $0x8] sm:$0xff]
    %v20 = vld [vmem:[%s3 + $0x10] sm:$0xff]
    %v21 = vld [vmem:[%s3 + $0x18] sm:$0xff]
    %v22 = vld [vmem:[%s3 + $0x20] sm:$0xff]
    %v23 = vld [vmem:[%s3 + $0x28] sm:$0xff]
    %v24 = vld [vmem:[%s3 + $0x30] sm:$0x1]
    %v25 = vld [vmem:[%s3 + $0x38] sm:$0xff]
    %v26 = vld [vmem:[%s3 + $0x40] sm:$0xff]
    %v27 = vld [vmem:[%s3 + $0x48] sm:$0xff]
    %v28 = vld [vmem:[%s3 + $0x50] sm:$0xff]
    %v29 = vld [vmem:[%s3 + $0x58] sm:$0x1]
    %v30 = vld [vmem:[%s3 + $0x60] sm:$0xff]
    %v31 = vld [vmem:[%s3 + $0x68] sm:$0xff]
    %v32 = vld [vmem:[%s3 + $0x70] sm:$0xff]
    %v33 = vld [vmem:[%s3 + $0x78] sm:$0xff]
    %v34 = vld [vmem:[%s3 + $0x80] sm:$0x1]
    %v35 = vld [vmem:[%s3 + $0x88] sm:$0xff]
    %v36 = vld [vmem:[%s3 + $0x90] sm:$0xff]
    %v37 = vld [vmem:[%s3 + $0x98] sm:$0xff]
    %v38 = vld [vmem:[%s3 + $0xa0] sm:$0xff]
    %v39 = vld [vmem:[%s3 + $0xa8] sm:$0xff]
    %v40 = vld [vmem:[%s3 + $0xb0] sm:$0xff]
    %v41 = vld [vmem:[%s3 + $0xb8] sm:$0x3]
    %v42 = vld [vmem:[%s3 + $0xc0] sm:$0x1]
    %v43 = vld [vmem:[%s0] sm:$0xff]
    %v44 = vld [vmem:[%s0 + $0x8] sm:$0xff]
    %vm45 = vcmask 138240
    %v47 = vsel %vm45, %v18, 0
    %v50 = vsel %vm45, %v43, 0
    %v53 = vsel %vm45, %v44, 0
    %55 = vmatprep.subr.mxu0 0.0
    %56 = vmatpush1.xpose.msra.mxu0 %v50
    %57 = vmatprep.subr.mxu0 0.0
    %58 = vmatpush1.xpose.msra.mxu0 %v53
    %59 = vmatprep.subr.mxu0 0.0
    %60 = vmatpush1.xpose.msra.mxu0 0.0
    %61 = vmatprep.subr.mxu0 0.0
    %62 = vmatpush1.xpose.msra.mxu0 0.0
    %63 = vmatprep.subr.mxu0 0.0
    %64 = vmatpush1.xpose.msra.mxu0 0.0
    %65 = vmatprep.subr.mxu0 0.0
    %66 = vmatpush1.xpose.msra.mxu0 0.0
    %67 = vmatprep.subr.mxu0 0.0
    %68 = vmatpush1.xpose.msra.mxu0 0.0
    %69 = vmatprep.subr.mxu0 0.0
    %70 = vmatpush1.xpose.msra.mxu0 0.0
    %71 = vmatprep.subr.mxu0 0.0
    %72 = vmatpush1.xpose.msra.mxu0 0.0
    %73 = vmatprep.subr.mxu0 0.0
    %74 = vmatpush1.xpose.msra.mxu0 0.0
    %75 = vmatprep.subr.mxu0 0.0
    %76 = vmatpush1.xpose.msra.mxu0 0.0
    %77 = vmatprep.subr.mxu0 0.0
    %78 = vmatpush1.xpose.msra.mxu0 0.0
    %79 = vmatprep.subr.mxu0 0.0
    %80 = vmatpush1.xpose.msra.mxu0 0.0
    %81 = vmatprep.subr.mxu0 0.0
    %82 = vmatpush1.xpose.msra.mxu0 0.0
    %83 = vmatprep.subr.mxu0 0.0
    %84 = vmatpush1.xpose.msra.mxu0 0.0
    %85 = vmatprep.subr.mxu0 0.0
    %86 = vmatpush1.xpose.msra.mxu0 0.0
    %87 = vmatprep.subr.mxu0 0.0
    %88 = vmatpush1.xpose.msra.mxu0 0.0
    %89 = vmatprep.subr.mxu0 0.0
    %90 = vmatpush1.xpose.msra.mxu0 0.0
    %91 = vmatprep.subr.mxu0 0.0
    %92 = vmatpush1.xpose.msra.mxu0 0.0
    %93 = vmatprep.subr.mxu0 0.0
    %94 = vmatpush1.xpose.msra.mxu0 0.0
    %95 = vmatprep.subr.mxu0 0.0
    %96 = vmatpush1.xpose.msra.mxu0 0.0
    %97 = vmatprep.subr.mxu0 0.0
    %98 = vmatpush1.xpose.msra.mxu0 0.0
    %99 = vmatprep.subr.mxu0 0.0
    %100 = vmatpush1.xpose.msra.mxu0 0.0
    %101 = vmatprep.subr.mxu0 0.0
    %102 = vmatpush1.xpose.msra.mxu0 0.0
    %103 = vmatprep.subr.mxu0 0.0
    %104 = vmatpush1.xpose.msra.mxu0 0.0
    %105 = vmatprep.subr.mxu0 0.0
    %106 = vmatpush1.xpose.msra.mxu0 0.0
    %107 = vmatprep.subr.mxu0 0.0
    %108 = vmatpush1.xpose.msra.mxu0 0.0
    %109 = vmatprep.subr.mxu0 0.0
    %110 = vmatpush1.xpose.msra.mxu0 0.0
    %111 = vmatprep.subr.mxu0 0.0
    %112 = vmatpush1.xpose.msra.mxu0 0.0
    %113 = vmatprep.subr.mxu0 0.0
    %114 = vmatpush1.xpose.msra.mxu0 0.0
    %115 = vmatprep.subr.mxu0 0.0
    %116 = vmatpush1.xpose.msra.mxu0 0.0
    %117 = vmatprep.subr.mxu0 0.0
    %118 = vmatpush1.xpose.msra.mxu0 0.0
    %119 = vmatprep.mubr.f32.mxu0 0.0
    %120 = vmatmul.mubr.f32.gmra.mrb[0].mxu0 %v47
    %v121 = vpop.f32.mrb[0].mxu0
    %v122 = vadd.f32 0.0, %v121
    %v123 = vpop.f32.mrb[0].mxu0
    %124 = vdwg.mxu0
    %v125 = vld [vmem:[%s1] sm:$0xff]
    %v126 = vld [vmem:[%s1 + $0x8] sm:$0xff]
    %v127 = vld [vmem:[%s2] sm:$0xff]
    %v128 = vld [vmem:[%s2 + $0x8] sm:$0xff]
    %vm129 = vcmask 64512
    %v130 = vsel %vm129, %v122, -inf
    %131 = vmax.xlane.f32.xlu0 %v130
    %v132 = vpop.xlane.xlu0 %131
    %v133 = vsub.f32 %v122, %v132
    %v134 = vmul.f32 %v133, 1.442695
    %v135 = vpow.pop %v134
    %v136 = vmul.f32 %v125, %v127
    %v138 = vsel %vm129, %v135, 0
    %140 = vmatprep.subr.mxu0 0.0
    %141 = vmatpush1.msra.mxu0 %v136
    %142 = vmatprep.subr.mxu0 0.0
    %143 = vmatpush1.msra.mxu0 0.0
    %144 = vmatprep.subr.mxu0 0.0
    %145 = vmatpush1.msra.mxu0 0.0
    %146 = vmatprep.subr.mxu0 0.0
    %147 = vmatpush1.msra.mxu0 0.0
    %148 = vmatprep.subr.mxu0 0.0
    %149 = vmatpush1.msra.mxu0 0.0
    %150 = vmatprep.subr.mxu0 0.0
    %151 = vmatpush1.msra.mxu0 0.0
    %152 = vmatprep.subr.mxu0 0.0
    %153 = vmatpush1.msra.mxu0 0.0
    %154 = vmatprep.subr.mxu0 0.0
    %155 = vmatpush1.msra.mxu0 0.0
    %156 = vmatprep.subr.mxu0 0.0
    %157 = vmatpush1.msra.mxu0 0.0
    %158 = vmatprep.subr.mxu0 0.0
    %159 = vmatpush1.msra.mxu0 0.0
    %160 = vmatprep.subr.mxu0 0.0
    %161 = vmatpush1.msra.mxu0 0.0
    %162 = vmatprep.subr.mxu0 0.0
    %163 = vmatpush1.msra.mxu0 0.0
    %164 = vmatprep.subr.mxu0 0.0
    %165 = vmatpush1.msra.mxu0 0.0
    %166 = vmatprep.subr.mxu0 0.0
    %167 = vmatpush1.msra.mxu0 0.0
    %168 = vmatprep.subr.mxu0 0.0
    %169 = vmatpush1.msra.mxu0 0.0
    %170 = vmatprep.subr.mxu0 0.0
    %171 = vmatpush1.msra.mxu0 0.0
    %172 = vmatprep.subr.mxu0 0.0
    %173 = vmatpush1.msra.mxu0 0.0
    %174 = vmatprep.subr.mxu0 0.0
    %175 = vmatpush1.msra.mxu0 0.0
    %176 = vmatprep.subr.mxu0 0.0
    %177 = vmatpush1.msra.mxu0 0.0
    %178 = vmatprep.subr.mxu0 0.0
    %179 = vmatpush1.msra.mxu0 0.0
    %180 = vmatprep.subr.mxu0 0.0
    %181 = vmatpush1.msra.mxu0 0.0
    %182 = vmatprep.subr.mxu0 0.0
    %183 = vmatpush1.msra.mxu0 0.0
    %184 = vmatprep.subr.mxu0 0.0
    %185 = vmatpush1.msra.mxu0 0.0
    %186 = vmatprep.subr.mxu0 0.0
    %187 = vmatpush1.msra.mxu0 0.0
    %188 = vmatprep.subr.mxu0 0.0
    %189 = vmatpush1.msra.mxu0 0.0
    %190 = vmatprep.subr.mxu0 0.0
    %191 = vmatpush1.msra.mxu0 0.0
    %192 = vmatprep.subr.mxu0 0.0
    %193 = vmatpush1.msra.mxu0 0.0
    %194 = vmatprep.subr.mxu0 0.0
    %195 = vmatpush1.msra.mxu0 0.0
    %196 = vmatprep.subr.mxu0 0.0
    %197 = vmatpush1.msra.mxu0 0.0
    %198 = vmatprep.subr.mxu0 0.0
    %199 = vmatpush1.msra.mxu0 0.0
    %200 = vmatprep.subr.mxu0 0.0
    %201 = vmatpush1.msra.mxu0 0.0
    %202 = vmatprep.subr.mxu0 0.0
    %203 = vmatpush1.msra.mxu0 0.0
    %204 = vmatprep.mubr.f32.mxu0 0.0
    %205 = vmatmul.mubr.f32.gmra.mrb[0].mxu0 %v138
    %v206 = vpop.f32.mrb[0].mxu0
    %v207 = vadd.f32 0.0, %v206
    %v208 = vpop.f32.mrb[0].mxu0
    %209 = vdwg.mxu0
    %210 = vmatprep.subr.mxu0 0.0
    %211 = vmatpush1.msra.mxu0 %v127
    %212 = vmatprep.subr.mxu0 0.0
    %213 = vmatpush1.msra.mxu0 0.0
    %214 = vmatprep.subr.mxu0 0.0
    %215 = vmatpush1.msra.mxu0 0.0
    %216 = vmatprep.subr.mxu0 0.0
    %217 = vmatpush1.msra.mxu0 0.0
    %218 = vmatprep.subr.mxu0 0.0
    %219 = vmatpush1.msra.mxu0 0.0
    %220 = vmatprep.subr.mxu0 0.0
    %221 = vmatpush1.msra.mxu0 0.0
    %222 = vmatprep.subr.mxu0 0.0
    %223 = vmatpush1.msra.mxu0 0.0
    %224 = vmatprep.subr.mxu0 0.0
    %225 = vmatpush1.msra.mxu0 0.0
    %226 = vmatprep.subr.mxu0 0.0
    %227 = vmatpush1.msra.mxu0 0.0
    %228 = vmatprep.subr.mxu0 0.0
    %229 = vmatpush1.msra.mxu0 0.0
    %230 = vmatprep.subr.mxu0 0.0
    %231 = vmatpush1.msra.mxu0 0.0
    %232 = vmatprep.subr.mxu0 0.0
    %233 = vmatpush1.msra.mxu0 0.0
    %234 = vmatprep.subr.mxu0 0.0
    %235 = vmatpush1.msra.mxu0 0.0
    %236 = vmatprep.subr.mxu0 0.0
    %237 = vmatpush1.msra.mxu0 0.0
    %238 = vmatprep.subr.mxu0 0.0
    %239 = vmatpush1.msra.mxu0 0.0
    %240 = vmatprep.subr.mxu0 0.0
    %241 = vmatpush1.msra.mxu0 0.0
    %242 = vmatprep.subr.mxu0 0.0
    %243 = vmatpush1.msra.mxu0 0.0
    %244 = vmatprep.subr.mxu0 0.0
    %245 = vmatpush1.msra.mxu0 0.0
    %246 = vmatprep.subr.mxu0 0.0
    %247 = vmatpush1.msra.mxu0 0.0
    %248 = vmatprep.subr.mxu0 0.0
    %249 = vmatpush1.msra.mxu0 0.0
    %250 = vmatprep.subr.mxu0 0.0
    %251 = vmatpush1.msra.mxu0 0.0
    %252 = vmatprep.subr.mxu0 0.0
    %253 = vmatpush1.msra.mxu0 0.0
    %254 = vmatprep.subr.mxu0 0.0
    %255 = vmatpush1.msra.mxu0 0.0
    %256 = vmatprep.subr.mxu0 0.0
    %257 = vmatpush1.msra.mxu0 0.0
    %258 = vmatprep.subr.mxu0 0.0
    %259 = vmatpush1.msra.mxu0 0.0
    %260 = vmatprep.subr.mxu0 0.0
    %261 = vmatpush1.msra.mxu0 0.0
    %262 = vmatprep.subr.mxu0 0.0
    %263 = vmatpush1.msra.mxu0 0.0
    %264 = vmatprep.subr.mxu0 0.0
    %265 = vmatpush1.msra.mxu0 0.0
    %266 = vmatprep.subr.mxu0 0.0
    %267 = vmatpush1.msra.mxu0 0.0
    %268 = vmatprep.subr.mxu0 0.0
    %269 = vmatpush1.msra.mxu0 0.0
    %270 = vmatprep.subr.mxu0 0.0
    %271 = vmatpush1.msra.mxu0 0.0
    %272 = vmatprep.subr.mxu0 0.0
    %273 = vmatpush1.msra.mxu0 0.0
    %274 = vmatprep.mubr.f32.mxu0 0.0
    %275 = vmatmul.mubr.f32.gmra.mrb[0].mxu0 %v138
    %v276 = vpop.f32.mrb[0].mxu0
    %v277 = vadd.f32 0.0, %v276
    %v278 = vpop.f32.mrb[0].mxu0
    %279 = vdwg.mxu0
    %v280 = vmax.f32 %v277, 1e-12
    %v281 = vrcp.pop %v280
    %v282 = vmul.f32 %v207, %v281
    %vm283 = vcmask 130112
    %v284 = vsel %vm283, %v122, -inf
    %285 = vmax.xlane.f32.xlu0 %v284
    %v286 = vpop.xlane.xlu0 %285
    %v287 = vsub.f32 %v122, %v286
    %v288 = vmul.f32 %v287, 1.442695
    %v289 = vpow.pop %v288
    %v290 = vmul.f32 %v126, %v128
    %292 = vrot.lane.b32.xlu0 %v289, 120
    %v293 = vpop.permute.xlu0 %292
    %v294 = vsel %vm129, %v293, 0
    %296 = vmatprep.subr.mxu0 0.0
    %297 = vmatpush1.msra.mxu0 %v290
    %298 = vmatprep.subr.mxu0 0.0
    %299 = vmatpush1.msra.mxu0 0.0
    %300 = vmatprep.subr.mxu0 0.0
    %301 = vmatpush1.msra.mxu0 0.0
    %302 = vmatprep.subr.mxu0 0.0
    %303 = vmatpush1.msra.mxu0 0.0
    %304 = vmatprep.subr.mxu0 0.0
    %305 = vmatpush1.msra.mxu0 0.0
    %306 = vmatprep.subr.mxu0 0.0
    %307 = vmatpush1.msra.mxu0 0.0
    %308 = vmatprep.subr.mxu0 0.0
    %309 = vmatpush1.msra.mxu0 0.0
    %310 = vmatprep.subr.mxu0 0.0
    %311 = vmatpush1.msra.mxu0 0.0
    %312 = vmatprep.subr.mxu0 0.0
    %313 = vmatpush1.msra.mxu0 0.0
    %314 = vmatprep.subr.mxu0 0.0
    %315 = vmatpush1.msra.mxu0 0.0
    %316 = vmatprep.subr.mxu0 0.0
    %317 = vmatpush1.msra.mxu0 0.0
    %318 = vmatprep.subr.mxu0 0.0
    %319 = vmatpush1.msra.mxu0 0.0
    %320 = vmatprep.subr.mxu0 0.0
    %321 = vmatpush1.msra.mxu0 0.0
    %322 = vmatprep.subr.mxu0 0.0
    %323 = vmatpush1.msra.mxu0 0.0
    %324 = vmatprep.subr.mxu0 0.0
    %325 = vmatpush1.msra.mxu0 0.0
    %326 = vmatprep.subr.mxu0 0.0
    %327 = vmatpush1.msra.mxu0 0.0
    %328 = vmatprep.subr.mxu0 0.0
    %329 = vmatpush1.msra.mxu0 0.0
    %330 = vmatprep.subr.mxu0 0.0
    %331 = vmatpush1.msra.mxu0 0.0
    %332 = vmatprep.subr.mxu0 0.0
    %333 = vmatpush1.msra.mxu0 0.0
    %334 = vmatprep.subr.mxu0 0.0
    %335 = vmatpush1.msra.mxu0 0.0
    %336 = vmatprep.subr.mxu0 0.0
    %337 = vmatpush1.msra.mxu0 0.0
    %338 = vmatprep.subr.mxu0 0.0
    %339 = vmatpush1.msra.mxu0 0.0
    %340 = vmatprep.subr.mxu0 0.0
    %341 = vmatpush1.msra.mxu0 0.0
    %342 = vmatprep.subr.mxu0 0.0
    %343 = vmatpush1.msra.mxu0 0.0
    %344 = vmatprep.subr.mxu0 0.0
    %345 = vmatpush1.msra.mxu0 0.0
    %346 = vmatprep.subr.mxu0 0.0
    %347 = vmatpush1.msra.mxu0 0.0
    %348 = vmatprep.subr.mxu0 0.0
    %349 = vmatpush1.msra.mxu0 0.0
    %350 = vmatprep.subr.mxu0 0.0
    %351 = vmatpush1.msra.mxu0 0.0
    %352 = vmatprep.subr.mxu0 0.0
    %353 = vmatpush1.msra.mxu0 0.0
    %354 = vmatprep.subr.mxu0 0.0
    %355 = vmatpush1.msra.mxu0 0.0
    %356 = vmatprep.subr.mxu0 0.0
    %357 = vmatpush1.msra.mxu0 0.0
    %358 = vmatprep.subr.mxu0 0.0
    %359 = vmatpush1.msra.mxu0 0.0
    %360 = vmatprep.mubr.f32.mxu0 0.0
    %361 = vmatmul.mubr.f32.gmra.mrb[0].mxu0 %v294
    %v362 = vpop.f32.mrb[0].mxu0
    %v363 = vadd.f32 0.0, %v362
    %v364 = vpop.f32.mrb[0].mxu0
    %365 = vdwg.mxu0
    %366 = vmatprep.subr.mxu0 0.0
    %367 = vmatpush1.msra.mxu0 %v128
    %368 = vmatprep.subr.mxu0 0.0
    %369 = vmatpush1.msra.mxu0 0.0
    %370 = vmatprep.subr.mxu0 0.0
    %371 = vmatpush1.msra.mxu0 0.0
    %372 = vmatprep.subr.mxu0 0.0
    %373 = vmatpush1.msra.mxu0 0.0
    %374 = vmatprep.subr.mxu0 0.0
    %375 = vmatpush1.msra.mxu0 0.0
    %376 = vmatprep.subr.mxu0 0.0
    %377 = vmatpush1.msra.mxu0 0.0
    %378 = vmatprep.subr.mxu0 0.0
    %379 = vmatpush1.msra.mxu0 0.0
    %380 = vmatprep.subr.mxu0 0.0
    %381 = vmatpush1.msra.mxu0 0.0
    %382 = vmatprep.subr.mxu0 0.0
    %383 = vmatpush1.msra.mxu0 0.0
    %384 = vmatprep.subr.mxu0 0.0
    %385 = vmatpush1.msra.mxu0 0.0
    %386 = vmatprep.subr.mxu0 0.0
    %387 = vmatpush1.msra.mxu0 0.0
    %388 = vmatprep.subr.mxu0 0.0
    %389 = vmatpush1.msra.mxu0 0.0
    %390 = vmatprep.subr.mxu0 0.0
    %391 = vmatpush1.msra.mxu0 0.0
    %392 = vmatprep.subr.mxu0 0.0
    %393 = vmatpush1.msra.mxu0 0.0
    %394 = vmatprep.subr.mxu0 0.0
    %395 = vmatpush1.msra.mxu0 0.0
    %396 = vmatprep.subr.mxu0 0.0
    %397 = vmatpush1.msra.mxu0 0.0
    %398 = vmatprep.subr.mxu0 0.0
    %399 = vmatpush1.msra.mxu0 0.0
    %400 = vmatprep.subr.mxu0 0.0
    %401 = vmatpush1.msra.mxu0 0.0
    %402 = vmatprep.subr.mxu0 0.0
    %403 = vmatpush1.msra.mxu0 0.0
    %404 = vmatprep.subr.mxu0 0.0
    %405 = vmatpush1.msra.mxu0 0.0
    %406 = vmatprep.subr.mxu0 0.0
    %407 = vmatpush1.msra.mxu0 0.0
    %408 = vmatprep.subr.mxu0 0.0
    %409 = vmatpush1.msra.mxu0 0.0
    %410 = vmatprep.subr.mxu0 0.0
    %411 = vmatpush1.msra.mxu0 0.0
    %412 = vmatprep.subr.mxu0 0.0
    %413 = vmatpush1.msra.mxu0 0.0
    %414 = vmatprep.subr.mxu0 0.0
    %415 = vmatpush1.msra.mxu0 0.0
    %416 = vmatprep.subr.mxu0 0.0
    %417 = vmatpush1.msra.mxu0 0.0
    %418 = vmatprep.subr.mxu0 0.0
    %419 = vmatpush1.msra.mxu0 0.0
    %420 = vmatprep.subr.mxu0 0.0
    %421 = vmatpush1.msra.mxu0 0.0
    %422 = vmatprep.subr.mxu0 0.0
    %423 = vmatpush1.msra.mxu0 0.0
    %424 = vmatprep.subr.mxu0 0.0
    %425 = vmatpush1.msra.mxu0 0.0
    %426 = vmatprep.subr.mxu0 0.0
    %427 = vmatpush1.msra.mxu0 0.0
    %428 = vmatprep.subr.mxu0 0.0
    %429 = vmatpush1.msra.mxu0 0.0
    %430 = vmatprep.mubr.f32.mxu0 0.0
    %431 = vmatmul.mubr.f32.gmra.mrb[0].mxu0 %v294
    %v432 = vpop.f32.mrb[0].mxu0
    %v433 = vadd.f32 0.0, %v432
    %v434 = vpop.f32.mrb[0].mxu0
    %435 = vdwg.mxu0
    %v436 = vmax.f32 %v433, 1e-12
    %v437 = vrcp.pop %v436
    %v438 = vmul.f32 %v363, %v437
    %vm439 = vcmask 130048
    %v441 = vsel %vm439, %v19, 0
    %v444 = vsel %vm439, %v20, 0
    %446 = vmatprep.subr.mxu0 0.0
    %447 = vmatpush1.msra.mxu0 %v282
    %448 = vmatprep.subr.mxu0 0.0
    %449 = vmatpush1.msra.mxu0 %v438
    %450 = vmatprep.subr.mxu0 0.0
    %451 = vmatpush1.msra.mxu0 0.0
    %452 = vmatprep.subr.mxu0 0.0
    %453 = vmatpush1.msra.mxu0 0.0
    %454 = vmatprep.subr.mxu0 0.0
    %455 = vmatpush1.msra.mxu0 0.0
    %456 = vmatprep.subr.mxu0 0.0
    %457 = vmatpush1.msra.mxu0 0.0
    %458 = vmatprep.subr.mxu0 0.0
    %459 = vmatpush1.msra.mxu0 0.0
    %460 = vmatprep.subr.mxu0 0.0
    %461 = vmatpush1.msra.mxu0 0.0
    %462 = vmatprep.subr.mxu0 0.0
    %463 = vmatpush1.msra.mxu0 0.0
    %464 = vmatprep.subr.mxu0 0.0
    %465 = vmatpush1.msra.mxu0 0.0
    %466 = vmatprep.subr.mxu0 0.0
    %467 = vmatpush1.msra.mxu0 0.0
    %468 = vmatprep.subr.mxu0 0.0
    %469 = vmatpush1.msra.mxu0 0.0
    %470 = vmatprep.subr.mxu0 0.0
    %471 = vmatpush1.msra.mxu0 0.0
    %472 = vmatprep.subr.mxu0 0.0
    %473 = vmatpush1.msra.mxu0 0.0
    %474 = vmatprep.subr.mxu0 0.0
    %475 = vmatpush1.msra.mxu0 0.0
    %476 = vmatprep.subr.mxu0 0.0
    %477 = vmatpush1.msra.mxu0 0.0
    %478 = vmatprep.subr.mxu0 0.0
    %479 = vmatpush1.msra.mxu0 0.0
    %480 = vmatprep.subr.mxu0 0.0
    %481 = vmatpush1.msra.mxu0 0.0
    %482 = vmatprep.subr.mxu0 0.0
    %483 = vmatpush1.msra.mxu0 0.0
    %484 = vmatprep.subr.mxu0 0.0
    %485 = vmatpush1.msra.mxu0 0.0
    %486 = vmatprep.subr.mxu0 0.0
    %487 = vmatpush1.msra.mxu0 0.0
    %488 = vmatprep.subr.mxu0 0.0
    %489 = vmatpush1.msra.mxu0 0.0
    %490 = vmatprep.subr.mxu0 0.0
    %491 = vmatpush1.msra.mxu0 0.0
    %492 = vmatprep.subr.mxu0 0.0
    %493 = vmatpush1.msra.mxu0 0.0
    %494 = vmatprep.subr.mxu0 0.0
    %495 = vmatpush1.msra.mxu0 0.0
    %496 = vmatprep.subr.mxu0 0.0
    %497 = vmatpush1.msra.mxu0 0.0
    %498 = vmatprep.subr.mxu0 0.0
    %499 = vmatpush1.msra.mxu0 0.0
    %500 = vmatprep.subr.mxu0 0.0
    %501 = vmatpush1.msra.mxu0 0.0
    %502 = vmatprep.subr.mxu0 0.0
    %503 = vmatpush1.msra.mxu0 0.0
    %504 = vmatprep.subr.mxu0 0.0
    %505 = vmatpush1.msra.mxu0 0.0
    %506 = vmatprep.subr.mxu0 0.0
    %507 = vmatpush1.msra.mxu0 0.0
    %508 = vmatprep.subr.mxu0 0.0
    %509 = vmatpush1.msra.mxu0 0.0
    %510 = vmatprep.mubr.f32.mxu0 0.0
    %511 = vmatmul.mubr.f32.gmra.mrb[0].mxu0 %v441
    %v512 = vpop.f32.mrb[0].mxu0
    %v513 = vadd.f32 0.0, %v512
    %v514 = vpop.f32.mrb[0].mxu0
    %515 = vmatprep.mubr.f32.mxu0 0.0
    %516 = vmatmul.mubr.f32.gmra.mrb[0].mxu0 %v444
    %v517 = vpop.f32.mrb[0].mxu0
    %v518 = vadd.f32 0.0, %v517
    %v519 = vpop.f32.mrb[0].mxu0
    %520 = vdwg.mxu0
    %v521 = vlaneseq
    %v522 = vshrl.u32 %v521, 7
    %v523 = vsub.s32 0, %v522
    %v524 = vrot.slane %v24, %v523
    %v526 = vsel %vm129, %v513, 0
    %v529 = vsel %vm129, %v518, 0
    %531 = vmatprep.subr.mxu0 0.0
    %532 = vmatpush1.msra.mxu0 %v23
    %533 = vmatprep.subr.mxu0 0.0
    %534 = vmatpush1.msra.mxu0 0.0
    %535 = vmatprep.subr.mxu0 0.0
    %536 = vmatpush1.msra.mxu0 0.0
    %537 = vmatprep.subr.mxu0 0.0
    %538 = vmatpush1.msra.mxu0 0.0
    %539 = vmatprep.subr.mxu0 0.0
    %540 = vmatpush1.msra.mxu0 0.0
    %541 = vmatprep.subr.mxu0 0.0
    %542 = vmatpush1.msra.mxu0 0.0
    %543 = vmatprep.subr.mxu0 0.0
    %544 = vmatpush1.msra.mxu0 0.0
    %545 = vmatprep.subr.mxu0 0.0
    %546 = vmatpush1.msra.mxu0 0.0
    %547 = vmatprep.subr.mxu0 0.0
    %548 = vmatpush1.msra.mxu0 0.0
    %549 = vmatprep.subr.mxu0 0.0
    %550 = vmatpush1.msra.mxu0 0.0
    %551 = vmatprep.subr.mxu0 0.0
    %552 = vmatpush1.msra.mxu0 0.0
    %553 = vmatprep.subr.mxu0 0.0
    %554 = vmatpush1.msra.mxu0 0.0
    %555 = vmatprep.subr.mxu0 0.0
    %556 = vmatpush1.msra.mxu0 0.0
    %557 = vmatprep.subr.mxu0 0.0
    %558 = vmatpush1.msra.mxu0 0.0
    %559 = vmatprep.subr.mxu0 0.0
    %560 = vmatpush1.msra.mxu0 0.0
    %561 = vmatprep.subr.mxu0 0.0
    %562 = vmatpush1.msra.mxu0 0.0
    %563 = vmatprep.subr.mxu0 0.0
    %564 = vmatpush1.msra.mxu0 0.0
    %565 = vmatprep.subr.mxu0 0.0
    %566 = vmatpush1.msra.mxu0 0.0
    %567 = vmatprep.subr.mxu0 0.0
    %568 = vmatpush1.msra.mxu0 0.0
    %569 = vmatprep.subr.mxu0 0.0
    %570 = vmatpush1.msra.mxu0 0.0
    %571 = vmatprep.subr.mxu0 0.0
    %572 = vmatpush1.msra.mxu0 0.0
    %573 = vmatprep.subr.mxu0 0.0
    %574 = vmatpush1.msra.mxu0 0.0
    %575 = vmatprep.subr.mxu0 0.0
    %576 = vmatpush1.msra.mxu0 0.0
    %577 = vmatprep.subr.mxu0 0.0
    %578 = vmatpush1.msra.mxu0 0.0
    %579 = vmatprep.subr.mxu0 0.0
    %580 = vmatpush1.msra.mxu0 0.0
    %581 = vmatprep.subr.mxu0 0.0
    %582 = vmatpush1.msra.mxu0 0.0
    %583 = vmatprep.subr.mxu0 0.0
    %584 = vmatpush1.msra.mxu0 0.0
    %585 = vmatprep.subr.mxu0 0.0
    %586 = vmatpush1.msra.mxu0 0.0
    %587 = vmatprep.subr.mxu0 0.0
    %588 = vmatpush1.msra.mxu0 0.0
    %589 = vmatprep.subr.mxu0 0.0
    %590 = vmatpush1.msra.mxu0 0.0
    %591 = vmatprep.subr.mxu0 0.0
    %592 = vmatpush1.msra.mxu0 0.0
    %593 = vmatprep.subr.mxu0 0.0
    %594 = vmatpush1.msra.mxu0 0.0
    %595 = vmatprep.mubr.f32.mxu0 0.0
    %596 = vmatmul.mubr.f32.gmra.mrb[0].mxu0 %v526
    %v597 = vpop.f32.mrb[0].mxu0
    %v598 = vadd.f32 %v524, %v597
    %v599 = vpop.f32.mrb[0].mxu0
    %600 = vmatprep.mubr.f32.mxu0 0.0
    %601 = vmatmul.mubr.f32.gmra.mrb[0].mxu0 %v529
    %v602 = vpop.f32.mrb[0].mxu0
    %v603 = vadd.f32 %v524, %v602
    %v604 = vpop.f32.mrb[0].mxu0
    %605 = vdwg.mxu0
    %v606 = vlaneseq
    %v607 = vshrl.u32 %v606, 7
    %v608 = vsub.s32 0, %v607
    %v609 = vrot.slane %v29, %v608
    %vm610 = vcmask 261120
    %v612 = vsel %vm610, 0.0, 0
    %614 = vmatprep.subr.mxu0 0.0
    %615 = vmatpush1.msra.mxu0 %v25
    %616 = vmatprep.subr.mxu0 0.0
    %617 = vmatpush1.msra.mxu0 %v26
    %618 = vmatprep.subr.mxu0 0.0
    %619 = vmatpush1.msra.mxu0 %v27
    %620 = vmatprep.subr.mxu0 0.0
    %621 = vmatpush1.msra.mxu0 %v28
    %622 = vmatprep.subr.mxu0 0.0
    %623 = vmatpush1.msra.mxu0 0.0
    %624 = vmatprep.subr.mxu0 0.0
    %625 = vmatpush1.msra.mxu0 0.0
    %626 = vmatprep.subr.mxu0 0.0
    %627 = vmatpush1.msra.mxu0 0.0
    %628 = vmatprep.subr.mxu0 0.0
    %629 = vmatpush1.msra.mxu0 0.0
    %630 = vmatprep.subr.mxu0 0.0
    %631 = vmatpush1.msra.mxu0 0.0
    %632 = vmatprep.subr.mxu0 0.0
    %633 = vmatpush1.msra.mxu0 0.0
    %634 = vmatprep.subr.mxu0 0.0
    %635 = vmatpush1.msra.mxu0 0.0
    %636 = vmatprep.subr.mxu0 0.0
    %637 = vmatpush1.msra.mxu0 0.0
    %638 = vmatprep.subr.mxu0 0.0
    %639 = vmatpush1.msra.mxu0 0.0
    %640 = vmatprep.subr.mxu0 0.0
    %641 = vmatpush1.msra.mxu0 0.0
    %642 = vmatprep.subr.mxu0 0.0
    %643 = vmatpush1.msra.mxu0 0.0
    %644 = vmatprep.subr.mxu0 0.0
    %645 = vmatpush1.msra.mxu0 0.0
    %646 = vmatprep.subr.mxu0 0.0
    %647 = vmatpush1.msra.mxu0 0.0
    %648 = vmatprep.subr.mxu0 0.0
    %649 = vmatpush1.msra.mxu0 0.0
    %650 = vmatprep.subr.mxu0 0.0
    %651 = vmatpush1.msra.mxu0 0.0
    %652 = vmatprep.subr.mxu0 0.0
    %653 = vmatpush1.msra.mxu0 0.0
    %654 = vmatprep.subr.mxu0 0.0
    %655 = vmatpush1.msra.mxu0 0.0
    %656 = vmatprep.subr.mxu0 0.0
    %657 = vmatpush1.msra.mxu0 0.0
    %658 = vmatprep.subr.mxu0 0.0
    %659 = vmatpush1.msra.mxu0 0.0
    %660 = vmatprep.subr.mxu0 0.0
    %661 = vmatpush1.msra.mxu0 0.0
    %662 = vmatprep.subr.mxu0 0.0
    %663 = vmatpush1.msra.mxu0 0.0
    %664 = vmatprep.subr.mxu0 0.0
    %665 = vmatpush1.msra.mxu0 0.0
    %666 = vmatprep.subr.mxu0 0.0
    %667 = vmatpush1.msra.mxu0 0.0
    %668 = vmatprep.subr.mxu0 0.0
    %669 = vmatpush1.msra.mxu0 0.0
    %670 = vmatprep.subr.mxu0 0.0
    %671 = vmatpush1.msra.mxu0 0.0
    %672 = vmatprep.subr.mxu0 0.0
    %673 = vmatpush1.msra.mxu0 0.0
    %674 = vmatprep.subr.mxu0 0.0
    %675 = vmatpush1.msra.mxu0 0.0
    %676 = vmatprep.subr.mxu0 0.0
    %677 = vmatpush1.msra.mxu0 0.0
    %678 = vmatprep.mubr.f32.mxu0 0.0
    %679 = vmatmul.mubr.f32.gmra.mrb[0].mxu0 %v612
    %v680 = vpop.f32.mrb[0].mxu0
    %v681 = vadd.f32 %v609, %v680
    %v682 = vpop.f32.mrb[0].mxu0
    %683 = vdwg.mxu0
    %v684 = vadd.f32 %v598, %v681
    %v685 = vxor.u32 %v684, 2147483648
    %v686 = vmul.f32 %v685, 1.442695
    %v687 = vpow.pop %v686
    %v688 = vadd.f32 %v687, 1.0
    %v689 = vrcp.pop %v688
    %v690 = vmul.f32 1.0, %v689
    %v692 = vrot.slane %v681, 2
    %v694 = vadd.f32 %v603, %v692
    %v695 = vxor.u32 %v694, 2147483648
    %v696 = vmul.f32 %v695, 1.442695
    %v697 = vpow.pop %v696
    %v698 = vadd.f32 %v697, 1.0
    %v699 = vrcp.pop %v698
    %v700 = vmul.f32 1.0, %v699
    %701 = vrot.lane.b32.xlu0 %v681, 96
    %v702 = vpop.permute.xlu0 %701
    %v704 = vmul.f32 %v690, %v702
    %706 = vrot.lane.b32.xlu0 %v704, 32
    %v707 = vpop.permute.xlu0 %706
    %v709 = vadd.f32 %v598, %v707
    %v710 = vtanh.pop %v709
    %711 = vrot.lane.b32.xlu0 %v692, 96
    %v712 = vpop.permute.xlu0 %711
    %v714 = vmul.f32 %v700, %v712
    %716 = vrot.lane.b32.xlu0 %v714, 32
    %v717 = vpop.permute.xlu0 %716
    %v719 = vadd.f32 %v603, %v717
    %v720 = vtanh.pop %v719
    %v721 = vsub.f32 1.0, %v690
    %723 = vrot.lane.b32.xlu0 %v710, 112
    %v724 = vpop.permute.xlu0 %723
    %v726 = vmul.f32 %v721, %v724
    %v727 = vmul.f32 %v690, 0.0
    %v728 = vadd.f32 %v726, %v727
    %v729 = vsub.f32 1.0, %v700
    %731 = vrot.lane.b32.xlu0 %v720, 112
    %v732 = vpop.permute.xlu0 %731
    %v734 = vmul.f32 %v729, %v732
    %v735 = vmul.f32 %v700, 0.0
    %v736 = vadd.f32 %v734, %v735
    %738 = vrot.lane.b32.xlu0 %v728, 112
    %v739 = vpop.permute.xlu0 %738
    %vm741 = vcmask 123904
    %742 = vst.msk [vmem:[#allocation2] sm:$0x3] %vm741, %v739
    %744 = vrot.lane.b32.xlu0 %v736, 80
    %v745 = vpop.permute.xlu0 %744
    %vm747 = vcmask 261254
    %748 = vst.msk [vmem:[#allocation2 + $0x8] sm:$0xc0] %vm747, %v745
    %v749 = vrot.slane %v736, 6
    %750 = vrot.lane.b32.xlu0 %v749, 80
    %v751 = vpop.permute.xlu0 %750
    %v753 = vsel %vm439, %v739, %v751
    %v755 = vsel %vm610, %v753, 0
    %757 = vmatprep.subr.mxu0 0.0
    %758 = vmatpush1.msra.mxu0 %v25
    %759 = vmatprep.subr.mxu0 0.0
    %760 = vmatpush1.msra.mxu0 %v26
    %761 = vmatprep.subr.mxu0 0.0
    %762 = vmatpush1.msra.mxu0 %v27
    %763 = vmatprep.subr.mxu0 0.0
    %764 = vmatpush1.msra.mxu0 %v28
    %765 = vmatprep.subr.mxu0 0.0
    %766 = vmatpush1.msra.mxu0 0.0
    %767 = vmatprep.subr.mxu0 0.0
    %768 = vmatpush1.msra.mxu0 0.0
    %769 = vmatprep.subr.mxu0 0.0
    %770 = vmatpush1.msra.mxu0 0.0
    %771 = vmatprep.subr.mxu0 0.0
    %772 = vmatpush1.msra.mxu0 0.0
    %773 = vmatprep.subr.mxu0 0.0
    %774 = vmatpush1.msra.mxu0 0.0
    %775 = vmatprep.subr.mxu0 0.0
    %776 = vmatpush1.msra.mxu0 0.0
    %777 = vmatprep.subr.mxu0 0.0
    %778 = vmatpush1.msra.mxu0 0.0
    %779 = vmatprep.subr.mxu0 0.0
    %780 = vmatpush1.msra.mxu0 0.0
    %781 = vmatprep.subr.mxu0 0.0
    %782 = vmatpush1.msra.mxu0 0.0
    %783 = vmatprep.subr.mxu0 0.0
    %784 = vmatpush1.msra.mxu0 0.0
    %785 = vmatprep.subr.mxu0 0.0
    %786 = vmatpush1.msra.mxu0 0.0
    %787 = vmatprep.subr.mxu0 0.0
    %788 = vmatpush1.msra.mxu0 0.0
    %789 = vmatprep.subr.mxu0 0.0
    %790 = vmatpush1.msra.mxu0 0.0
    %791 = vmatprep.subr.mxu0 0.0
    %792 = vmatpush1.msra.mxu0 0.0
    %793 = vmatprep.subr.mxu0 0.0
    %794 = vmatpush1.msra.mxu0 0.0
    %795 = vmatprep.subr.mxu0 0.0
    %796 = vmatpush1.msra.mxu0 0.0
    %797 = vmatprep.subr.mxu0 0.0
    %798 = vmatpush1.msra.mxu0 0.0
    %799 = vmatprep.subr.mxu0 0.0
    %800 = vmatpush1.msra.mxu0 0.0
    %801 = vmatprep.subr.mxu0 0.0
    %802 = vmatpush1.msra.mxu0 0.0
    %803 = vmatprep.subr.mxu0 0.0
    %804 = vmatpush1.msra.mxu0 0.0
    %805 = vmatprep.subr.mxu0 0.0
    %806 = vmatpush1.msra.mxu0 0.0
    %807 = vmatprep.subr.mxu0 0.0
    %808 = vmatpush1.msra.mxu0 0.0
    %809 = vmatprep.subr.mxu0 0.0
    %810 = vmatpush1.msra.mxu0 0.0
    %811 = vmatprep.subr.mxu0 0.0
    %812 = vmatpush1.msra.mxu0 0.0
    %813 = vmatprep.subr.mxu0 0.0
    %814 = vmatpush1.msra.mxu0 0.0
    %815 = vmatprep.subr.mxu0 0.0
    %816 = vmatpush1.msra.mxu0 0.0
    %817 = vmatprep.subr.mxu0 0.0
    %818 = vmatpush1.msra.mxu0 0.0
    %819 = vmatprep.subr.mxu0 0.0
    %820 = vmatpush1.msra.mxu0 0.0
    %821 = vmatprep.mubr.f32.mxu0 0.0
    %822 = vmatmul.mubr.f32.gmra.mrb[0].mxu0 %v755
    %v823 = vpop.f32.mrb[0].mxu0
    %v824 = vadd.f32 %v609, %v823
    %v825 = vpop.f32.mrb[0].mxu0
    %826 = vdwg.mxu0
    %v828 = vrot.slane %v824, 6
    %v830 = vadd.f32 %v598, %v828
    %v831 = vxor.u32 %v830, 2147483648
    %v832 = vmul.f32 %v831, 1.442695
    %v833 = vpow.pop %v832
    %v834 = vadd.f32 %v833, 1.0
    %v835 = vrcp.pop %v834
    %v836 = vmul.f32 1.0, %v835
    %v837 = vrot.slane %v824, 4
    %v839 = vadd.f32 %v603, %v837
    %v840 = vxor.u32 %v839, 2147483648
    %v841 = vmul.f32 %v840, 1.442695
    %v842 = vpow.pop %v841
    %v843 = vadd.f32 %v842, 1.0
    %v844 = vrcp.pop %v843
    %v845 = vmul.f32 1.0, %v844
    %846 = vrot.lane.b32.xlu0 %v828, 96
    %v847 = vpop.permute.xlu0 %846
    %v849 = vmul.f32 %v836, %v847
    %851 = vrot.lane.b32.xlu0 %v849, 32
    %v852 = vpop.permute.xlu0 %851
    %v854 = vadd.f32 %v598, %v852
    %v855 = vtanh.pop %v854
    %856 = vrot.lane.b32.xlu0 %v837, 96
    %v857 = vpop.permute.xlu0 %856
    %v859 = vmul.f32 %v845, %v857
    %861 = vrot.lane.b32.xlu0 %v859, 32
    %v862 = vpop.permute.xlu0 %861
    %v864 = vadd.f32 %v603, %v862
    %v865 = vtanh.pop %v864
    %v866 = vsub.f32 1.0, %v836
    %868 = vrot.lane.b32.xlu0 %v855, 112
    %v869 = vpop.permute.xlu0 %868
    %v871 = vmul.f32 %v866, %v869
    %v872 = vrot.slane %v753, 6
    %873 = vrot.lane.b32.xlu0 %v872, 16
    %v874 = vpop.permute.xlu0 %873
    %v876 = vmul.f32 %v836, %v874
    %v877 = vadd.f32 %v871, %v876
    %v878 = vsub.f32 1.0, %v845
    %880 = vrot.lane.b32.xlu0 %v865, 112
    %v881 = vpop.permute.xlu0 %880
    %v883 = vmul.f32 %v878, %v881
    %v884 = vrot.slane %v753, 4
    %885 = vrot.lane.b32.xlu0 %v884, 48
    %v886 = vpop.permute.xlu0 %885
    %v888 = vmul.f32 %v845, %v886
    %v889 = vadd.f32 %v883, %v888
    %891 = vrot.lane.b32.xlu0 %v877, 112
    %v892 = vpop.permute.xlu0 %891
    %vm894 = vcmask 125954
    %895 = vst.msk [vmem:[#allocation2] sm:$0xc] %vm894, %v892
    %897 = vrot.lane.b32.xlu0 %v889, 80
    %v898 = vpop.permute.xlu0 %897
    %vm900 = vcmask 259204
    %901 = vst.msk [vmem:[#allocation2 + $0x8] sm:$0x30] %vm900, %v898
    %v902 = vrot.slane %v889, 2
    %903 = vrot.lane.b32.xlu0 %v902, 80
    %v904 = vpop.permute.xlu0 %903
    %v906 = vsel %vm439, %v892, %v904
    %v908 = vrot.slane %v906, 2
    %v909 = vsel %vm610, %v908, 0
    %911 = vmatprep.subr.mxu0 0.0
    %912 = vmatpush1.msra.mxu0 %v25
    %913 = vmatprep.subr.mxu0 0.0
    %914 = vmatpush1.msra.mxu0 %v26
    %915 = vmatprep.subr.mxu0 0.0
    %916 = vmatpush1.msra.mxu0 %v27
    %917 = vmatprep.subr.mxu0 0.0
    %918 = vmatpush1.msra.mxu0 %v28
    %919 = vmatprep.subr.mxu0 0.0
    %920 = vmatpush1.msra.mxu0 0.0
    %921 = vmatprep.subr.mxu0 0.0
    %922 = vmatpush1.msra.mxu0 0.0
    %923 = vmatprep.subr.mxu0 0.0
    %924 = vmatpush1.msra.mxu0 0.0
    %925 = vmatprep.subr.mxu0 0.0
    %926 = vmatpush1.msra.mxu0 0.0
    %927 = vmatprep.subr.mxu0 0.0
    %928 = vmatpush1.msra.mxu0 0.0
    %929 = vmatprep.subr.mxu0 0.0
    %930 = vmatpush1.msra.mxu0 0.0
    %931 = vmatprep.subr.mxu0 0.0
    %932 = vmatpush1.msra.mxu0 0.0
    %933 = vmatprep.subr.mxu0 0.0
    %934 = vmatpush1.msra.mxu0 0.0
    %935 = vmatprep.subr.mxu0 0.0
    %936 = vmatpush1.msra.mxu0 0.0
    %937 = vmatprep.subr.mxu0 0.0
    %938 = vmatpush1.msra.mxu0 0.0
    %939 = vmatprep.subr.mxu0 0.0
    %940 = vmatpush1.msra.mxu0 0.0
    %941 = vmatprep.subr.mxu0 0.0
    %942 = vmatpush1.msra.mxu0 0.0
    %943 = vmatprep.subr.mxu0 0.0
    %944 = vmatpush1.msra.mxu0 0.0
    %945 = vmatprep.subr.mxu0 0.0
    %946 = vmatpush1.msra.mxu0 0.0
    %947 = vmatprep.subr.mxu0 0.0
    %948 = vmatpush1.msra.mxu0 0.0
    %949 = vmatprep.subr.mxu0 0.0
    %950 = vmatpush1.msra.mxu0 0.0
    %951 = vmatprep.subr.mxu0 0.0
    %952 = vmatpush1.msra.mxu0 0.0
    %953 = vmatprep.subr.mxu0 0.0
    %954 = vmatpush1.msra.mxu0 0.0
    %955 = vmatprep.subr.mxu0 0.0
    %956 = vmatpush1.msra.mxu0 0.0
    %957 = vmatprep.subr.mxu0 0.0
    %958 = vmatpush1.msra.mxu0 0.0
    %959 = vmatprep.subr.mxu0 0.0
    %960 = vmatpush1.msra.mxu0 0.0
    %961 = vmatprep.subr.mxu0 0.0
    %962 = vmatpush1.msra.mxu0 0.0
    %963 = vmatprep.subr.mxu0 0.0
    %964 = vmatpush1.msra.mxu0 0.0
    %965 = vmatprep.subr.mxu0 0.0
    %966 = vmatpush1.msra.mxu0 0.0
    %967 = vmatprep.subr.mxu0 0.0
    %968 = vmatpush1.msra.mxu0 0.0
    %969 = vmatprep.subr.mxu0 0.0
    %970 = vmatpush1.msra.mxu0 0.0
    %971 = vmatprep.subr.mxu0 0.0
    %972 = vmatpush1.msra.mxu0 0.0
    %973 = vmatprep.subr.mxu0 0.0
    %974 = vmatpush1.msra.mxu0 0.0
    %975 = vmatprep.mubr.f32.mxu0 0.0
    %976 = vmatmul.mubr.f32.gmra.mrb[0].mxu0 %v909
    %v977 = vpop.f32.mrb[0].mxu0
    %v978 = vadd.f32 %v609, %v977
    %v979 = vpop.f32.mrb[0].mxu0
    %980 = vdwg.mxu0
    %v982 = vrot.slane %v978, 4
    %v984 = vadd.f32 %v598, %v982
    %v985 = vxor.u32 %v984, 2147483648
    %v986 = vmul.f32 %v985, 1.442695
    %v987 = vpow.pop %v986
    %v988 = vadd.f32 %v987, 1.0
    %v989 = vrcp.pop %v988
    %v990 = vmul.f32 1.0, %v989
    %v991 = vrot.slane %v978, 6
    %v993 = vadd.f32 %v603, %v991
    %v994 = vxor.u32 %v993, 2147483648
    %v995 = vmul.f32 %v994, 1.442695
    %v996 = vpow.pop %v995
    %v997 = vadd.f32 %v996, 1.0
    %v998 = vrcp.pop %v997
    %v999 = vmul.f32 1.0, %v998
    %1000 = vrot.lane.b32.xlu0 %v982, 96
    %v1001 = vpop.permute.xlu0 %1000
    %v1003 = vmul.f32 %v990, %v1001
    %1005 = vrot.lane.b32.xlu0 %v1003, 32
    %v1006 = vpop.permute.xlu0 %1005
    %v1008 = vadd.f32 %v598, %v1006
    %v1009 = vtanh.pop %v1008
    %1010 = vrot.lane.b32.xlu0 %v991, 96
    %v1011 = vpop.permute.xlu0 %1010
    %v1013 = vmul.f32 %v999, %v1011
    %1015 = vrot.lane.b32.xlu0 %v1013, 32
    %v1016 = vpop.permute.xlu0 %1015
    %v1018 = vadd.f32 %v603, %v1016
    %v1019 = vtanh.pop %v1018
    %v1020 = vsub.f32 1.0, %v990
    %1022 = vrot.lane.b32.xlu0 %v1009, 112
    %v1023 = vpop.permute.xlu0 %1022
    %v1025 = vmul.f32 %v1020, %v1023
    %v1026 = vrot.slane %v906, 6
    %1027 = vrot.lane.b32.xlu0 %v1026, 16
    %v1028 = vpop.permute.xlu0 %1027
    %v1030 = vmul.f32 %v990, %v1028
    %v1031 = vadd.f32 %v1025, %v1030
    %v1032 = vsub.f32 1.0, %v999
    %1034 = vrot.lane.b32.xlu0 %v1019, 112
    %v1035 = vpop.permute.xlu0 %1034
    %v1037 = vmul.f32 %v1032, %v1035
    %1038 = vrot.lane.b32.xlu0 %v906, 48
    %v1039 = vpop.permute.xlu0 %1038
    %v1041 = vmul.f32 %v999, %v1039
    %v1042 = vadd.f32 %v1037, %v1041
    %1044 = vrot.lane.b32.xlu0 %v1031, 112
    %v1045 = vpop.permute.xlu0 %1044
    %vm1047 = vcmask 128004
    %1048 = vst.msk [vmem:[#allocation2] sm:$0x30] %vm1047, %v1045
    %1050 = vrot.lane.b32.xlu0 %v1042, 80
    %v1051 = vpop.permute.xlu0 %1050
    %vm1053 = vcmask 257154
    %1054 = vst.msk [vmem:[#allocation2 + $0x8] sm:$0xc] %vm1053, %v1051
    %v1055 = vrot.slane %v1042, 6
    %1056 = vrot.lane.b32.xlu0 %v1055, 80
    %v1057 = vpop.permute.xlu0 %1056
    %v1059 = vsel %vm439, %v1045, %v1057
    %v1061 = vrot.slane %v1059, 4
    %v1062 = vsel %vm610, %v1061, 0
    %1064 = vmatprep.subr.mxu0 0.0
    %1065 = vmatpush1.msra.mxu0 %v25
    %1066 = vmatprep.subr.mxu0 0.0
    %1067 = vmatpush1.msra.mxu0 %v26
    %1068 = vmatprep.subr.mxu0 0.0
    %1069 = vmatpush1.msra.mxu0 %v27
    %1070 = vmatprep.subr.mxu0 0.0
    %1071 = vmatpush1.msra.mxu0 %v28
    %1072 = vmatprep.subr.mxu0 0.0
    %1073 = vmatpush1.msra.mxu0 0.0
    %1074 = vmatprep.subr.mxu0 0.0
    %1075 = vmatpush1.msra.mxu0 0.0
    %1076 = vmatprep.subr.mxu0 0.0
    %1077 = vmatpush1.msra.mxu0 0.0
    %1078 = vmatprep.subr.mxu0 0.0
    %1079 = vmatpush1.msra.mxu0 0.0
    %1080 = vmatprep.subr.mxu0 0.0
    %1081 = vmatpush1.msra.mxu0 0.0
    %1082 = vmatprep.subr.mxu0 0.0
    %1083 = vmatpush1.msra.mxu0 0.0
    %1084 = vmatprep.subr.mxu0 0.0
    %1085 = vmatpush1.msra.mxu0 0.0
    %1086 = vmatprep.subr.mxu0 0.0
    %1087 = vmatpush1.msra.mxu0 0.0
    %1088 = vmatprep.subr.mxu0 0.0
    %1089 = vmatpush1.msra.mxu0 0.0
    %1090 = vmatprep.subr.mxu0 0.0
    %1091 = vmatpush1.msra.mxu0 0.0
    %1092 = vmatprep.subr.mxu0 0.0
    %1093 = vmatpush1.msra.mxu0 0.0
    %1094 = vmatprep.subr.mxu0 0.0
    %1095 = vmatpush1.msra.mxu0 0.0
    %1096 = vmatprep.subr.mxu0 0.0
    %1097 = vmatpush1.msra.mxu0 0.0
    %1098 = vmatprep.subr.mxu0 0.0
    %1099 = vmatpush1.msra.mxu0 0.0
    %1100 = vmatprep.subr.mxu0 0.0
    %1101 = vmatpush1.msra.mxu0 0.0
    %1102 = vmatprep.subr.mxu0 0.0
    %1103 = vmatpush1.msra.mxu0 0.0
    %1104 = vmatprep.subr.mxu0 0.0
    %1105 = vmatpush1.msra.mxu0 0.0
    %1106 = vmatprep.subr.mxu0 0.0
    %1107 = vmatpush1.msra.mxu0 0.0
    %1108 = vmatprep.subr.mxu0 0.0
    %1109 = vmatpush1.msra.mxu0 0.0
    %1110 = vmatprep.subr.mxu0 0.0
    %1111 = vmatpush1.msra.mxu0 0.0
    %1112 = vmatprep.subr.mxu0 0.0
    %1113 = vmatpush1.msra.mxu0 0.0
    %1114 = vmatprep.subr.mxu0 0.0
    %1115 = vmatpush1.msra.mxu0 0.0
    %1116 = vmatprep.subr.mxu0 0.0
    %1117 = vmatpush1.msra.mxu0 0.0
    %1118 = vmatprep.subr.mxu0 0.0
    %1119 = vmatpush1.msra.mxu0 0.0
    %1120 = vmatprep.subr.mxu0 0.0
    %1121 = vmatpush1.msra.mxu0 0.0
    %1122 = vmatprep.subr.mxu0 0.0
    %1123 = vmatpush1.msra.mxu0 0.0
    %1124 = vmatprep.subr.mxu0 0.0
    %1125 = vmatpush1.msra.mxu0 0.0
    %1126 = vmatprep.subr.mxu0 0.0
    %1127 = vmatpush1.msra.mxu0 0.0
    %1128 = vmatprep.mubr.f32.mxu0 0.0
    %1129 = vmatmul.mubr.f32.gmra.mrb[0].mxu0 %v1062
    %v1130 = vpop.f32.mrb[0].mxu0
    %v1131 = vadd.f32 %v609, %v1130
    %v1132 = vpop.f32.mrb[0].mxu0
    %1133 = vdwg.mxu0
    %v1135 = vrot.slane %v1131, 2
    %v1137 = vadd.f32 %v598, %v1135
    %v1138 = vxor.u32 %v1137, 2147483648
    %v1139 = vmul.f32 %v1138, 1.442695
    %v1140 = vpow.pop %v1139
    %v1141 = vadd.f32 %v1140, 1.0
    %v1142 = vrcp.pop %v1141
    %v1143 = vmul.f32 1.0, %v1142
    %v1144 = vadd.f32 %v603, %v1131
    %v1145 = vxor.u32 %v1144, 2147483648
    %v1146 = vmul.f32 %v1145, 1.442695
    %v1147 = vpow.pop %v1146
    %v1148 = vadd.f32 %v1147, 1.0
    %v1149 = vrcp.pop %v1148
    %v1150 = vmul.f32 1.0, %v1149
    %1151 = vrot.lane.b32.xlu0 %v1135, 96
    %v1152 = vpop.permute.xlu0 %1151
    %v1154 = vmul.f32 %v1143, %v1152
    %1156 = vrot.lane.b32.xlu0 %v1154, 32
    %v1157 = vpop.permute.xlu0 %1156
    %v1159 = vadd.f32 %v598, %v1157
    %v1160 = vtanh.pop %v1159
    %1161 = vrot.lane.b32.xlu0 %v1131, 96
    %v1162 = vpop.permute.xlu0 %1161
    %v1164 = vmul.f32 %v1150, %v1162
    %1166 = vrot.lane.b32.xlu0 %v1164, 32
    %v1167 = vpop.permute.xlu0 %1166
    %v1169 = vadd.f32 %v603, %v1167
    %v1170 = vtanh.pop %v1169
    %v1171 = vsub.f32 1.0, %v1143
    %1173 = vrot.lane.b32.xlu0 %v1160, 112
    %v1174 = vpop.permute.xlu0 %1173
    %v1176 = vmul.f32 %v1171, %v1174
    %v1177 = vrot.slane %v1059, 6
    %1178 = vrot.lane.b32.xlu0 %v1177, 16
    %v1179 = vpop.permute.xlu0 %1178
    %v1181 = vmul.f32 %v1143, %v1179
    %v1182 = vadd.f32 %v1176, %v1181
    %v1183 = vsub.f32 1.0, %v1150
    %1185 = vrot.lane.b32.xlu0 %v1170, 112
    %v1186 = vpop.permute.xlu0 %1185
    %v1188 = vmul.f32 %v1183, %v1186
    %1189 = vrot.lane.b32.xlu0 %v1061, 48
    %v1190 = vpop.permute.xlu0 %1189
    %v1192 = vmul.f32 %v1150, %v1190
    %v1193 = vadd.f32 %v1188, %v1192
    %1195 = vrot.lane.b32.xlu0 %v1182, 112
    %v1196 = vpop.permute.xlu0 %1195
    %vm1198 = vcmask 130054
    %1199 = vst.msk [vmem:[#allocation2] sm:$0xc0] %vm1198, %v1196
    %1201 = vrot.lane.b32.xlu0 %v1193, 80
    %v1202 = vpop.permute.xlu0 %1201
    %vm1204 = vcmask 255104
    %1205 = vst.msk [vmem:[#allocation2 + $0x8] sm:$0x3] %vm1204, %v1202
    %v1206 = vrot.slane %v1193, 2
    %1207 = vrot.lane.b32.xlu0 %v1206, 80
    %v1208 = vpop.permute.xlu0 %1207
    %v1210 = vsel %vm439, %v1196, %v1208
    %v1212 = vrot.slane %v1210, 6
    %v1213 = vsel %vm610, %v1212, 0
    %1215 = vmatprep.subr.mxu0 0.0
    %1216 = vmatpush1.msra.mxu0 %v25
    %1217 = vmatprep.subr.mxu0 0.0
    %1218 = vmatpush1.msra.mxu0 %v26
    %1219 = vmatprep.subr.mxu0 0.0
    %1220 = vmatpush1.msra.mxu0 %v27
    %1221 = vmatprep.subr.mxu0 0.0
    %1222 = vmatpush1.msra.mxu0 %v28
    %1223 = vmatprep.subr.mxu0 0.0
    %1224 = vmatpush1.msra.mxu0 0.0
    %1225 = vmatprep.subr.mxu0 0.0
    %1226 = vmatpush1.msra.mxu0 0.0
    %1227 = vmatprep.subr.mxu0 0.0
    %1228 = vmatpush1.msra.mxu0 0.0
    %1229 = vmatprep.subr.mxu0 0.0
    %1230 = vmatpush1.msra.mxu0 0.0
    %1231 = vmatprep.subr.mxu0 0.0
    %1232 = vmatpush1.msra.mxu0 0.0
    %1233 = vmatprep.subr.mxu0 0.0
    %1234 = vmatpush1.msra.mxu0 0.0
    %1235 = vmatprep.subr.mxu0 0.0
    %1236 = vmatpush1.msra.mxu0 0.0
    %1237 = vmatprep.subr.mxu0 0.0
    %1238 = vmatpush1.msra.mxu0 0.0
    %1239 = vmatprep.subr.mxu0 0.0
    %1240 = vmatpush1.msra.mxu0 0.0
    %1241 = vmatprep.subr.mxu0 0.0
    %1242 = vmatpush1.msra.mxu0 0.0
    %1243 = vmatprep.subr.mxu0 0.0
    %1244 = vmatpush1.msra.mxu0 0.0
    %1245 = vmatprep.subr.mxu0 0.0
    %1246 = vmatpush1.msra.mxu0 0.0
    %1247 = vmatprep.subr.mxu0 0.0
    %1248 = vmatpush1.msra.mxu0 0.0
    %1249 = vmatprep.subr.mxu0 0.0
    %1250 = vmatpush1.msra.mxu0 0.0
    %1251 = vmatprep.subr.mxu0 0.0
    %1252 = vmatpush1.msra.mxu0 0.0
    %1253 = vmatprep.subr.mxu0 0.0
    %1254 = vmatpush1.msra.mxu0 0.0
    %1255 = vmatprep.subr.mxu0 0.0
    %1256 = vmatpush1.msra.mxu0 0.0
    %1257 = vmatprep.subr.mxu0 0.0
    %1258 = vmatpush1.msra.mxu0 0.0
    %1259 = vmatprep.subr.mxu0 0.0
    %1260 = vmatpush1.msra.mxu0 0.0
    %1261 = vmatprep.subr.mxu0 0.0
    %1262 = vmatpush1.msra.mxu0 0.0
    %1263 = vmatprep.subr.mxu0 0.0
    %1264 = vmatpush1.msra.mxu0 0.0
    %1265 = vmatprep.subr.mxu0 0.0
    %1266 = vmatpush1.msra.mxu0 0.0
    %1267 = vmatprep.subr.mxu0 0.0
    %1268 = vmatpush1.msra.mxu0 0.0
    %1269 = vmatprep.subr.mxu0 0.0
    %1270 = vmatpush1.msra.mxu0 0.0
    %1271 = vmatprep.subr.mxu0 0.0
    %1272 = vmatpush1.msra.mxu0 0.0
    %1273 = vmatprep.subr.mxu0 0.0
    %1274 = vmatpush1.msra.mxu0 0.0
    %1275 = vmatprep.subr.mxu0 0.0
    %1276 = vmatpush1.msra.mxu0 0.0
    %1277 = vmatprep.subr.mxu0 0.0
    %1278 = vmatpush1.msra.mxu0 0.0
    %1279 = vmatprep.mubr.f32.mxu0 0.0
    %1280 = vmatmul.mubr.f32.gmra.mrb[0].mxu0 %v1213
    %v1281 = vpop.f32.mrb[0].mxu0
    %v1282 = vadd.f32 %v609, %v1281
    %v1283 = vpop.f32.mrb[0].mxu0
    %1284 = vdwg.mxu0
    %v1285 = vadd.f32 %v603, %v1282
    %v1286 = vxor.u32 %v1285, 2147483648
    %v1287 = vmul.f32 %v1286, 1.442695
    %v1288 = vpow.pop %v1287
    %v1289 = vadd.f32 %v1288, 1.0
    %v1290 = vrcp.pop %v1289
    %v1291 = vmul.f32 1.0, %v1290
    %v1293 = vrot.slane %v1282, 2
    %v1295 = vadd.f32 %v598, %v1293
    %v1296 = vxor.u32 %v1295, 2147483648
    %v1297 = vmul.f32 %v1296, 1.442695
    %v1298 = vpow.pop %v1297
    %v1299 = vadd.f32 %v1298, 1.0
    %v1300 = vrcp.pop %v1299
    %v1301 = vmul.f32 1.0, %v1300
    %1302 = vrot.lane.b32.xlu0 %v1282, 96
    %v1303 = vpop.permute.xlu0 %1302
    %v1305 = vmul.f32 %v1291, %v1303
    %1307 = vrot.lane.b32.xlu0 %v1305, 32
    %v1308 = vpop.permute.xlu0 %1307
    %v1310 = vadd.f32 %v603, %v1308
    %v1311 = vtanh.pop %v1310
    %1312 = vrot.lane.b32.xlu0 %v1293, 96
    %v1313 = vpop.permute.xlu0 %1312
    %v1315 = vmul.f32 %v1301, %v1313
    %1317 = vrot.lane.b32.xlu0 %v1315, 32
    %v1318 = vpop.permute.xlu0 %1317
    %v1320 = vadd.f32 %v598, %v1318
    %v1321 = vtanh.pop %v1320
    %v1322 = vsub.f32 1.0, %v1291
    %1324 = vrot.lane.b32.xlu0 %v1311, 112
    %v1325 = vpop.permute.xlu0 %1324
    %v1327 = vmul.f32 %v1322, %v1325
    %1328 = vrot.lane.b32.xlu0 %v1212, 16
    %v1329 = vpop.permute.xlu0 %1328
    %v1331 = vmul.f32 %v1291, %v1329
    %v1332 = vadd.f32 %v1327, %v1331
    %v1333 = vsub.f32 1.0, %v1301
    %1335 = vrot.lane.b32.xlu0 %v1321, 112
    %v1336 = vpop.permute.xlu0 %1335
    %v1338 = vmul.f32 %v1333, %v1336
    %1339 = vrot.lane.b32.xlu0 %v1210, 48
    %v1340 = vpop.permute.xlu0 %1339
    %v1342 = vmul.f32 %v1301, %v1340
    %v1343 = vadd.f32 %v1338, %v1342
    %1345 = vrot.lane.b32.xlu0 %v1332, 112
    %v1346 = vpop.permute.xlu0 %1345
    %1348 = vst.msk [vmem:[#allocation2 + $0x8] sm:$0x3] %vm741, %v1346
    %1350 = vrot.lane.b32.xlu0 %v1343, 80
    %v1351 = vpop.permute.xlu0 %1350
    %1353 = vst.msk [vmem:[#allocation2] sm:$0xc0] %vm747, %v1351
    %v1354 = vrot.slane %v1343, 6
    %1355 = vrot.lane.b32.xlu0 %v1354, 80
    %v1356 = vpop.permute.xlu0 %1355
    %v1358 = vsel %vm439, %v1346, %v1356
    %v1360 = vsel %vm610, %v1358, 0
    %1362 = vmatprep.subr.mxu0 0.0
    %1363 = vmatpush1.msra.mxu0 %v25
    %1364 = vmatprep.subr.mxu0 0.0
    %1365 = vmatpush1.msra.mxu0 %v26
    %1366 = vmatprep.subr.mxu0 0.0
    %1367 = vmatpush1.msra.mxu0 %v27
    %1368 = vmatprep.subr.mxu0 0.0
    %1369 = vmatpush1.msra.mxu0 %v28
    %1370 = vmatprep.subr.mxu0 0.0
    %1371 = vmatpush1.msra.mxu0 0.0
    %1372 = vmatprep.subr.mxu0 0.0
    %1373 = vmatpush1.msra.mxu0 0.0
    %1374 = vmatprep.subr.mxu0 0.0
    %1375 = vmatpush1.msra.mxu0 0.0
    %1376 = vmatprep.subr.mxu0 0.0
    %1377 = vmatpush1.msra.mxu0 0.0
    %1378 = vmatprep.subr.mxu0 0.0
    %1379 = vmatpush1.msra.mxu0 0.0
    %1380 = vmatprep.subr.mxu0 0.0
    %1381 = vmatpush1.msra.mxu0 0.0
    %1382 = vmatprep.subr.mxu0 0.0
    %1383 = vmatpush1.msra.mxu0 0.0
    %1384 = vmatprep.subr.mxu0 0.0
    %1385 = vmatpush1.msra.mxu0 0.0
    %1386 = vmatprep.subr.mxu0 0.0
    %1387 = vmatpush1.msra.mxu0 0.0
    %1388 = vmatprep.subr.mxu0 0.0
    %1389 = vmatpush1.msra.mxu0 0.0
    %1390 = vmatprep.subr.mxu0 0.0
    %1391 = vmatpush1.msra.mxu0 0.0
    %1392 = vmatprep.subr.mxu0 0.0
    %1393 = vmatpush1.msra.mxu0 0.0
    %1394 = vmatprep.subr.mxu0 0.0
    %1395 = vmatpush1.msra.mxu0 0.0
    %1396 = vmatprep.subr.mxu0 0.0
    %1397 = vmatpush1.msra.mxu0 0.0
    %1398 = vmatprep.subr.mxu0 0.0
    %1399 = vmatpush1.msra.mxu0 0.0
    %1400 = vmatprep.subr.mxu0 0.0
    %1401 = vmatpush1.msra.mxu0 0.0
    %1402 = vmatprep.subr.mxu0 0.0
    %1403 = vmatpush1.msra.mxu0 0.0
    %1404 = vmatprep.subr.mxu0 0.0
    %1405 = vmatpush1.msra.mxu0 0.0
    %1406 = vmatprep.subr.mxu0 0.0
    %1407 = vmatpush1.msra.mxu0 0.0
    %1408 = vmatprep.subr.mxu0 0.0
    %1409 = vmatpush1.msra.mxu0 0.0
    %1410 = vmatprep.subr.mxu0 0.0
    %1411 = vmatpush1.msra.mxu0 0.0
    %1412 = vmatprep.subr.mxu0 0.0
    %1413 = vmatpush1.msra.mxu0 0.0
    %1414 = vmatprep.subr.mxu0 0.0
    %1415 = vmatpush1.msra.mxu0 0.0
    %1416 = vmatprep.subr.mxu0 0.0
    %1417 = vmatpush1.msra.mxu0 0.0
    %1418 = vmatprep.subr.mxu0 0.0
    %1419 = vmatpush1.msra.mxu0 0.0
    %1420 = vmatprep.subr.mxu0 0.0
    %1421 = vmatpush1.msra.mxu0 0.0
    %1422 = vmatprep.subr.mxu0 0.0
    %1423 = vmatpush1.msra.mxu0 0.0
    %1424 = vmatprep.subr.mxu0 0.0
    %1425 = vmatpush1.msra.mxu0 0.0
    %1426 = vmatprep.mubr.f32.mxu0 0.0
    %1427 = vmatmul.mubr.f32.gmra.mrb[0].mxu0 %v1360
    %v1428 = vpop.f32.mrb[0].mxu0
    %v1429 = vadd.f32 %v609, %v1428
    %v1430 = vpop.f32.mrb[0].mxu0
    %1431 = vdwg.mxu0
    %v1433 = vrot.slane %v1429, 6
    %v1435 = vadd.f32 %v603, %v1433
    %v1436 = vxor.u32 %v1435, 2147483648
    %v1437 = vmul.f32 %v1436, 1.442695
    %v1438 = vpow.pop %v1437
    %v1439 = vadd.f32 %v1438, 1.0
    %v1440 = vrcp.pop %v1439
    %v1441 = vmul.f32 1.0, %v1440
    %v1442 = vrot.slane %v1429, 4
    %v1444 = vadd.f32 %v598, %v1442
    %v1445 = vxor.u32 %v1444, 2147483648
    %v1446 = vmul.f32 %v1445, 1.442695
    %v1447 = vpow.pop %v1446
    %v1448 = vadd.f32 %v1447, 1.0
    %v1449 = vrcp.pop %v1448
    %v1450 = vmul.f32 1.0, %v1449
    %1451 = vrot.lane.b32.xlu0 %v1433, 96
    %v1452 = vpop.permute.xlu0 %1451
    %v1454 = vmul.f32 %v1441, %v1452
    %1456 = vrot.lane.b32.xlu0 %v1454, 32
    %v1457 = vpop.permute.xlu0 %1456
    %v1459 = vadd.f32 %v603, %v1457
    %v1460 = vtanh.pop %v1459
    %1461 = vrot.lane.b32.xlu0 %v1442, 96
    %v1462 = vpop.permute.xlu0 %1461
    %v1464 = vmul.f32 %v1450, %v1462
    %1466 = vrot.lane.b32.xlu0 %v1464, 32
    %v1467 = vpop.permute.xlu0 %1466
    %v1469 = vadd.f32 %v598, %v1467
    %v1470 = vtanh.pop %v1469
    %v1471 = vsub.f32 1.0, %v1441
    %1473 = vrot.lane.b32.xlu0 %v1460, 112
    %v1474 = vpop.permute.xlu0 %1473
    %v1476 = vmul.f32 %v1471, %v1474
    %v1477 = vrot.slane %v1358, 6
    %1478 = vrot.lane.b32.xlu0 %v1477, 16
    %v1479 = vpop.permute.xlu0 %1478
    %v1481 = vmul.f32 %v1441, %v1479
    %v1482 = vadd.f32 %v1476, %v1481
    %v1483 = vsub.f32 1.0, %v1450
    %1485 = vrot.lane.b32.xlu0 %v1470, 112
    %v1486 = vpop.permute.xlu0 %1485
    %v1488 = vmul.f32 %v1483, %v1486
    %v1489 = vrot.slane %v1358, 4
    %1490 = vrot.lane.b32.xlu0 %v1489, 48
    %v1491 = vpop.permute.xlu0 %1490
    %v1493 = vmul.f32 %v1450, %v1491
    %v1494 = vadd.f32 %v1488, %v1493
    %1496 = vrot.lane.b32.xlu0 %v1482, 112
    %v1497 = vpop.permute.xlu0 %1496
    %1499 = vst.msk [vmem:[#allocation2 + $0x8] sm:$0xc] %vm894, %v1497
    %1501 = vrot.lane.b32.xlu0 %v1494, 80
    %v1502 = vpop.permute.xlu0 %1501
    %1504 = vst.msk [vmem:[#allocation2] sm:$0x30] %vm900, %v1502
    %v1505 = vrot.slane %v1494, 2
    %1506 = vrot.lane.b32.xlu0 %v1505, 80
    %v1507 = vpop.permute.xlu0 %1506
    %v1509 = vsel %vm439, %v1497, %v1507
    %v1511 = vrot.slane %v1509, 2
    %v1512 = vsel %vm610, %v1511, 0
    %1514 = vmatprep.subr.mxu0 0.0
    %1515 = vmatpush1.msra.mxu0 %v25
    %1516 = vmatprep.subr.mxu0 0.0
    %1517 = vmatpush1.msra.mxu0 %v26
    %1518 = vmatprep.subr.mxu0 0.0
    %1519 = vmatpush1.msra.mxu0 %v27
    %1520 = vmatprep.subr.mxu0 0.0
    %1521 = vmatpush1.msra.mxu0 %v28
    %1522 = vmatprep.subr.mxu0 0.0
    %1523 = vmatpush1.msra.mxu0 0.0
    %1524 = vmatprep.subr.mxu0 0.0
    %1525 = vmatpush1.msra.mxu0 0.0
    %1526 = vmatprep.subr.mxu0 0.0
    %1527 = vmatpush1.msra.mxu0 0.0
    %1528 = vmatprep.subr.mxu0 0.0
    %1529 = vmatpush1.msra.mxu0 0.0
    %1530 = vmatprep.subr.mxu0 0.0
    %1531 = vmatpush1.msra.mxu0 0.0
    %1532 = vmatprep.subr.mxu0 0.0
    %1533 = vmatpush1.msra.mxu0 0.0
    %1534 = vmatprep.subr.mxu0 0.0
    %1535 = vmatpush1.msra.mxu0 0.0
    %1536 = vmatprep.subr.mxu0 0.0
    %1537 = vmatpush1.msra.mxu0 0.0
    %1538 = vmatprep.subr.mxu0 0.0
    %1539 = vmatpush1.msra.mxu0 0.0
    %1540 = vmatprep.subr.mxu0 0.0
    %1541 = vmatpush1.msra.mxu0 0.0
    %1542 = vmatprep.subr.mxu0 0.0
    %1543 = vmatpush1.msra.mxu0 0.0
    %1544 = vmatprep.subr.mxu0 0.0
    %1545 = vmatpush1.msra.mxu0 0.0
    %1546 = vmatprep.subr.mxu0 0.0
    %1547 = vmatpush1.msra.mxu0 0.0
    %1548 = vmatprep.subr.mxu0 0.0
    %1549 = vmatpush1.msra.mxu0 0.0
    %1550 = vmatprep.subr.mxu0 0.0
    %1551 = vmatpush1.msra.mxu0 0.0
    %1552 = vmatprep.subr.mxu0 0.0
    %1553 = vmatpush1.msra.mxu0 0.0
    %1554 = vmatprep.subr.mxu0 0.0
    %1555 = vmatpush1.msra.mxu0 0.0
    %1556 = vmatprep.subr.mxu0 0.0
    %1557 = vmatpush1.msra.mxu0 0.0
    %1558 = vmatprep.subr.mxu0 0.0
    %1559 = vmatpush1.msra.mxu0 0.0
    %1560 = vmatprep.subr.mxu0 0.0
    %1561 = vmatpush1.msra.mxu0 0.0
    %1562 = vmatprep.subr.mxu0 0.0
    %1563 = vmatpush1.msra.mxu0 0.0
    %1564 = vmatprep.subr.mxu0 0.0
    %1565 = vmatpush1.msra.mxu0 0.0
    %1566 = vmatprep.subr.mxu0 0.0
    %1567 = vmatpush1.msra.mxu0 0.0
    %1568 = vmatprep.subr.mxu0 0.0
    %1569 = vmatpush1.msra.mxu0 0.0
    %1570 = vmatprep.subr.mxu0 0.0
    %1571 = vmatpush1.msra.mxu0 0.0
    %1572 = vmatprep.subr.mxu0 0.0
    %1573 = vmatpush1.msra.mxu0 0.0
    %1574 = vmatprep.subr.mxu0 0.0
    %1575 = vmatpush1.msra.mxu0 0.0
    %1576 = vmatprep.subr.mxu0 0.0
    %1577 = vmatpush1.msra.mxu0 0.0
    %1578 = vmatprep.mubr.f32.mxu0 0.0
    %1579 = vmatmul.mubr.f32.gmra.mrb[0].mxu0 %v1512
    %v1580 = vpop.f32.mrb[0].mxu0
    %v1581 = vadd.f32 %v609, %v1580
    %v1582 = vpop.f32.mrb[0].mxu0
    %1583 = vdwg.mxu0
    %v1585 = vrot.slane %v1581, 4
    %v1587 = vadd.f32 %v603, %v1585
    %v1588 = vxor.u32 %v1587, 2147483648
    %v1589 = vmul.f32 %v1588, 1.442695
    %v1590 = vpow.pop %v1589
    %v1591 = vadd.f32 %v1590, 1.0
    %v1592 = vrcp.pop %v1591
    %v1593 = vmul.f32 1.0, %v1592
    %v1594 = vrot.slane %v1581, 6
    %v1596 = vadd.f32 %v598, %v1594
    %v1597 = vxor.u32 %v1596, 2147483648
    %v1598 = vmul.f32 %v1597, 1.442695
    %v1599 = vpow.pop %v1598
    %v1600 = vadd.f32 %v1599, 1.0
    %v1601 = vrcp.pop %v1600
    %v1602 = vmul.f32 1.0, %v1601
    %1603 = vrot.lane.b32.xlu0 %v1585, 96
    %v1604 = vpop.permute.xlu0 %1603
    %v1606 = vmul.f32 %v1593, %v1604
    %1608 = vrot.lane.b32.xlu0 %v1606, 32
    %v1609 = vpop.permute.xlu0 %1608
    %v1611 = vadd.f32 %v603, %v1609
    %v1612 = vtanh.pop %v1611
    %1613 = vrot.lane.b32.xlu0 %v1594, 96
    %v1614 = vpop.permute.xlu0 %1613
    %v1616 = vmul.f32 %v1602, %v1614
    %1618 = vrot.lane.b32.xlu0 %v1616, 32
    %v1619 = vpop.permute.xlu0 %1618
    %v1621 = vadd.f32 %v598, %v1619
    %v1622 = vtanh.pop %v1621
    %v1623 = vsub.f32 1.0, %v1593
    %1625 = vrot.lane.b32.xlu0 %v1612, 112
    %v1626 = vpop.permute.xlu0 %1625
    %v1628 = vmul.f32 %v1623, %v1626
    %v1629 = vrot.slane %v1509, 6
    %1630 = vrot.lane.b32.xlu0 %v1629, 16
    %v1631 = vpop.permute.xlu0 %1630
    %v1633 = vmul.f32 %v1593, %v1631
    %v1634 = vadd.f32 %v1628, %v1633
    %v1635 = vsub.f32 1.0, %v1602
    %1637 = vrot.lane.b32.xlu0 %v1622, 112
    %v1638 = vpop.permute.xlu0 %1637
    %v1640 = vmul.f32 %v1635, %v1638
    %1641 = vrot.lane.b32.xlu0 %v1509, 48
    %v1642 = vpop.permute.xlu0 %1641
    %v1644 = vmul.f32 %v1602, %v1642
    %v1645 = vadd.f32 %v1640, %v1644
    %1647 = vrot.lane.b32.xlu0 %v1634, 112
    %v1648 = vpop.permute.xlu0 %1647
    %1650 = vst.msk [vmem:[#allocation2 + $0x8] sm:$0x30] %vm1047, %v1648
    %1652 = vrot.lane.b32.xlu0 %v1645, 80
    %v1653 = vpop.permute.xlu0 %1652
    %1655 = vst.msk [vmem:[#allocation2] sm:$0xc] %vm1053, %v1653
    %v1656 = vrot.slane %v1645, 6
    %1657 = vrot.lane.b32.xlu0 %v1656, 80
    %v1658 = vpop.permute.xlu0 %1657
    %v1660 = vsel %vm439, %v1648, %v1658
    %v1662 = vrot.slane %v1660, 4
    %v1663 = vsel %vm610, %v1662, 0
    %1665 = vmatprep.subr.mxu0 0.0
    %1666 = vmatpush1.msra.mxu0 %v25
    %1667 = vmatprep.subr.mxu0 0.0
    %1668 = vmatpush1.msra.mxu0 %v26
    %1669 = vmatprep.subr.mxu0 0.0
    %1670 = vmatpush1.msra.mxu0 %v27
    %1671 = vmatprep.subr.mxu0 0.0
    %1672 = vmatpush1.msra.mxu0 %v28
    %1673 = vmatprep.subr.mxu0 0.0
    %1674 = vmatpush1.msra.mxu0 0.0
    %1675 = vmatprep.subr.mxu0 0.0
    %1676 = vmatpush1.msra.mxu0 0.0
    %1677 = vmatprep.subr.mxu0 0.0
    %1678 = vmatpush1.msra.mxu0 0.0
    %1679 = vmatprep.subr.mxu0 0.0
    %1680 = vmatpush1.msra.mxu0 0.0
    %1681 = vmatprep.subr.mxu0 0.0
    %1682 = vmatpush1.msra.mxu0 0.0
    %1683 = vmatprep.subr.mxu0 0.0
    %1684 = vmatpush1.msra.mxu0 0.0
    %1685 = vmatprep.subr.mxu0 0.0
    %1686 = vmatpush1.msra.mxu0 0.0
    %1687 = vmatprep.subr.mxu0 0.0
    %1688 = vmatpush1.msra.mxu0 0.0
    %1689 = vmatprep.subr.mxu0 0.0
    %1690 = vmatpush1.msra.mxu0 0.0
    %1691 = vmatprep.subr.mxu0 0.0
    %1692 = vmatpush1.msra.mxu0 0.0
    %1693 = vmatprep.subr.mxu0 0.0
    %1694 = vmatpush1.msra.mxu0 0.0
    %1695 = vmatprep.subr.mxu0 0.0
    %1696 = vmatpush1.msra.mxu0 0.0
    %1697 = vmatprep.subr.mxu0 0.0
    %1698 = vmatpush1.msra.mxu0 0.0
    %1699 = vmatprep.subr.mxu0 0.0
    %1700 = vmatpush1.msra.mxu0 0.0
    %1701 = vmatprep.subr.mxu0 0.0
    %1702 = vmatpush1.msra.mxu0 0.0
    %1703 = vmatprep.subr.mxu0 0.0
    %1704 = vmatpush1.msra.mxu0 0.0
    %1705 = vmatprep.subr.mxu0 0.0
    %1706 = vmatpush1.msra.mxu0 0.0
    %1707 = vmatprep.subr.mxu0 0.0
    %1708 = vmatpush1.msra.mxu0 0.0
    %1709 = vmatprep.subr.mxu0 0.0
    %1710 = vmatpush1.msra.mxu0 0.0
    %1711 = vmatprep.subr.mxu0 0.0
    %1712 = vmatpush1.msra.mxu0 0.0
    %1713 = vmatprep.subr.mxu0 0.0
    %1714 = vmatpush1.msra.mxu0 0.0
    %1715 = vmatprep.subr.mxu0 0.0
    %1716 = vmatpush1.msra.mxu0 0.0
    %1717 = vmatprep.subr.mxu0 0.0
    %1718 = vmatpush1.msra.mxu0 0.0
    %1719 = vmatprep.subr.mxu0 0.0
    %1720 = vmatpush1.msra.mxu0 0.0
    %1721 = vmatprep.subr.mxu0 0.0
    %1722 = vmatpush1.msra.mxu0 0.0
    %1723 = vmatprep.subr.mxu0 0.0
    %1724 = vmatpush1.msra.mxu0 0.0
    %1725 = vmatprep.subr.mxu0 0.0
    %1726 = vmatpush1.msra.mxu0 0.0
    %1727 = vmatprep.subr.mxu0 0.0
    %1728 = vmatpush1.msra.mxu0 0.0
    %1729 = vmatprep.mubr.f32.mxu0 0.0
    %1730 = vmatmul.mubr.f32.gmra.mrb[0].mxu0 %v1663
    %v1731 = vpop.f32.mrb[0].mxu0
    %v1732 = vadd.f32 %v609, %v1731
    %v1733 = vpop.f32.mrb[0].mxu0
    %1734 = vdwg.mxu0
    %v1736 = vrot.slane %v1732, 2
    %v1738 = vadd.f32 %v603, %v1736
    %v1739 = vxor.u32 %v1738, 2147483648
    %v1740 = vmul.f32 %v1739, 1.442695
    %v1741 = vpow.pop %v1740
    %v1742 = vadd.f32 %v1741, 1.0
    %v1743 = vrcp.pop %v1742
    %v1744 = vmul.f32 1.0, %v1743
    %v1745 = vadd.f32 %v598, %v1732
    %v1746 = vxor.u32 %v1745, 2147483648
    %v1747 = vmul.f32 %v1746, 1.442695
    %v1748 = vpow.pop %v1747
    %v1749 = vadd.f32 %v1748, 1.0
    %v1750 = vrcp.pop %v1749
    %v1751 = vmul.f32 1.0, %v1750
    %1752 = vrot.lane.b32.xlu0 %v1736, 96
    %v1753 = vpop.permute.xlu0 %1752
    %v1755 = vmul.f32 %v1744, %v1753
    %1757 = vrot.lane.b32.xlu0 %v1755, 32
    %v1758 = vpop.permute.xlu0 %1757
    %v1760 = vadd.f32 %v603, %v1758
    %v1761 = vtanh.pop %v1760
    %1762 = vrot.lane.b32.xlu0 %v1732, 96
    %v1763 = vpop.permute.xlu0 %1762
    %v1765 = vmul.f32 %v1751, %v1763
    %1767 = vrot.lane.b32.xlu0 %v1765, 32
    %v1768 = vpop.permute.xlu0 %1767
    %v1770 = vadd.f32 %v598, %v1768
    %v1771 = vtanh.pop %v1770
    %v1772 = vsub.f32 1.0, %v1744
    %1774 = vrot.lane.b32.xlu0 %v1761, 112
    %v1775 = vpop.permute.xlu0 %1774
    %v1777 = vmul.f32 %v1772, %v1775
    %v1778 = vrot.slane %v1660, 6
    %1779 = vrot.lane.b32.xlu0 %v1778, 16
    %v1780 = vpop.permute.xlu0 %1779
    %v1782 = vmul.f32 %v1744, %v1780
    %v1783 = vadd.f32 %v1777, %v1782
    %v1784 = vsub.f32 1.0, %v1751
    %1786 = vrot.lane.b32.xlu0 %v1771, 112
    %v1787 = vpop.permute.xlu0 %1786
    %v1789 = vmul.f32 %v1784, %v1787
    %1790 = vrot.lane.b32.xlu0 %v1662, 48
    %v1791 = vpop.permute.xlu0 %1790
    %v1793 = vmul.f32 %v1751, %v1791
    %v1794 = vadd.f32 %v1789, %v1793
    %1796 = vrot.lane.b32.xlu0 %v1783, 112
    %v1797 = vpop.permute.xlu0 %1796
    %1799 = vst.msk [vmem:[#allocation2 + $0x8] sm:$0xc0] %vm1198, %v1797
    %1801 = vrot.lane.b32.xlu0 %v1794, 80
    %v1802 = vpop.permute.xlu0 %1801
    %1804 = vst.msk [vmem:[#allocation2] sm:$0x3] %vm1204, %v1802
    %v1805 = vld [vmem:[#allocation2] sm:$0xff]
    %v1806 = vld [vmem:[#allocation2 + $0x8] sm:$0xff]
    %v1807 = vlaneseq
    %v1808 = vshrl.u32 %v1807, 7
    %v1809 = vsub.s32 0, %v1808
    %v1810 = vrot.slane %v34, %v1809
    %v1812 = vsel %vm610, %v1805, 0
    %v1815 = vsel %vm610, %v1806, 0
    %1817 = vmatprep.subr.mxu0 0.0
    %1818 = vmatpush1.msra.mxu0 %v30
    %1819 = vmatprep.subr.mxu0 0.0
    %1820 = vmatpush1.msra.mxu0 %v31
    %1821 = vmatprep.subr.mxu0 0.0
    %1822 = vmatpush1.msra.mxu0 %v32
    %1823 = vmatprep.subr.mxu0 0.0
    %1824 = vmatpush1.msra.mxu0 %v33
    %1825 = vmatprep.subr.mxu0 0.0
    %1826 = vmatpush1.msra.mxu0 0.0
    %1827 = vmatprep.subr.mxu0 0.0
    %1828 = vmatpush1.msra.mxu0 0.0
    %1829 = vmatprep.subr.mxu0 0.0
    %1830 = vmatpush1.msra.mxu0 0.0
    %1831 = vmatprep.subr.mxu0 0.0
    %1832 = vmatpush1.msra.mxu0 0.0
    %1833 = vmatprep.subr.mxu0 0.0
    %1834 = vmatpush1.msra.mxu0 0.0
    %1835 = vmatprep.subr.mxu0 0.0
    %1836 = vmatpush1.msra.mxu0 0.0
    %1837 = vmatprep.subr.mxu0 0.0
    %1838 = vmatpush1.msra.mxu0 0.0
    %1839 = vmatprep.subr.mxu0 0.0
    %1840 = vmatpush1.msra.mxu0 0.0
    %1841 = vmatprep.subr.mxu0 0.0
    %1842 = vmatpush1.msra.mxu0 0.0
    %1843 = vmatprep.subr.mxu0 0.0
    %1844 = vmatpush1.msra.mxu0 0.0
    %1845 = vmatprep.subr.mxu0 0.0
    %1846 = vmatpush1.msra.mxu0 0.0
    %1847 = vmatprep.subr.mxu0 0.0
    %1848 = vmatpush1.msra.mxu0 0.0
    %1849 = vmatprep.subr.mxu0 0.0
    %1850 = vmatpush1.msra.mxu0 0.0
    %1851 = vmatprep.subr.mxu0 0.0
    %1852 = vmatpush1.msra.mxu0 0.0
    %1853 = vmatprep.subr.mxu0 0.0
    %1854 = vmatpush1.msra.mxu0 0.0
    %1855 = vmatprep.subr.mxu0 0.0
    %1856 = vmatpush1.msra.mxu0 0.0
    %1857 = vmatprep.subr.mxu0 0.0
    %1858 = vmatpush1.msra.mxu0 0.0
    %1859 = vmatprep.subr.mxu0 0.0
    %1860 = vmatpush1.msra.mxu0 0.0
    %1861 = vmatprep.subr.mxu0 0.0
    %1862 = vmatpush1.msra.mxu0 0.0
    %1863 = vmatprep.subr.mxu0 0.0
    %1864 = vmatpush1.msra.mxu0 0.0
    %1865 = vmatprep.subr.mxu0 0.0
    %1866 = vmatpush1.msra.mxu0 0.0
    %1867 = vmatprep.subr.mxu0 0.0
    %1868 = vmatpush1.msra.mxu0 0.0
    %1869 = vmatprep.subr.mxu0 0.0
    %1870 = vmatpush1.msra.mxu0 0.0
    %1871 = vmatprep.subr.mxu0 0.0
    %1872 = vmatpush1.msra.mxu0 0.0
    %1873 = vmatprep.subr.mxu0 0.0
    %1874 = vmatpush1.msra.mxu0 0.0
    %1875 = vmatprep.subr.mxu0 0.0
    %1876 = vmatpush1.msra.mxu0 0.0
    %1877 = vmatprep.subr.mxu0 0.0
    %1878 = vmatpush1.msra.mxu0 0.0
    %1879 = vmatprep.subr.mxu0 0.0
    %1880 = vmatpush1.msra.mxu0 0.0
    %1881 = vmatprep.mubr.f32.mxu0 0.0
    %1882 = vmatmul.mubr.f32.gmra.mrb[0].mxu0 %v1812
    %v1883 = vpop.f32.mrb[0].mxu0
    %v1884 = vadd.f32 %v1810, %v1883
    %v1885 = vpop.f32.mrb[0].mxu0
    %1886 = vmatprep.mubr.f32.mxu0 0.0
    %1887 = vmatmul.mubr.f32.gmra.mrb[0].mxu0 %v1815
    %v1888 = vpop.f32.mrb[0].mxu0
    %v1889 = vadd.f32 %v1810, %v1888
    %v1890 = vpop.f32.mrb[0].mxu0
    %1891 = vdwg.mxu0
    %v1892 = vmax.f32 %v1884, 0.0
    %v1893 = vmax.f32 %v1889, 0.0
    %v1894 = vlaneseq
    %v1895 = vshrl.u32 %v1894, 7
    %v1896 = vsub.s32 0, %v1895
    %v1897 = vrot.slane %v42, %v1896
    %vm1898 = vcmask 408576
    %v1900 = vsel %vm1898, %v1892, 0
    %v1903 = vsel %vm1898, %v1893, 0
    %vm1905 = vcmask 1041408
    %v1907 = vsel %vm1905, %v41, 0
    %1909 = vmatprep.subr.mxu0 0.0
    %1910 = vmatpush1.msra.mxu0 %v35
    %1911 = vmatprep.subr.mxu0 0.0
    %1912 = vmatpush1.msra.mxu0 %v36
    %1913 = vmatprep.subr.mxu0 0.0
    %1914 = vmatpush1.msra.mxu0 %v37
    %1915 = vmatprep.subr.mxu0 0.0
    %1916 = vmatpush1.msra.mxu0 %v38
    %1917 = vmatprep.subr.mxu0 0.0
    %1918 = vmatpush1.msra.mxu0 %v39
    %1919 = vmatprep.subr.mxu0 0.0
    %1920 = vmatpush1.msra.mxu0 %v40
    %1921 = vmatprep.subr.mxu0 0.0
    %1922 = vmatpush1.msra.mxu0 %v1907
    %1923 = vmatprep.subr.mxu0 0.0
    %1924 = vmatpush1.msra.mxu0 0.0
    %1925 = vmatprep.subr.mxu0 0.0
    %1926 = vmatpush1.msra.mxu0 0.0
    %1927 = vmatprep.subr.mxu0 0.0
    %1928 = vmatpush1.msra.mxu0 0.0
    %1929 = vmatprep.subr.mxu0 0.0
    %1930 = vmatpush1.msra.mxu0 0.0
    %1931 = vmatprep.subr.mxu0 0.0
    %1932 = vmatpush1.msra.mxu0 0.0
    %1933 = vmatprep.subr.mxu0 0.0
    %1934 = vmatpush1.msra.mxu0 0.0
    %1935 = vmatprep.subr.mxu0 0.0
    %1936 = vmatpush1.msra.mxu0 0.0
    %1937 = vmatprep.subr.mxu0 0.0
    %1938 = vmatpush1.msra.mxu0 0.0
    %1939 = vmatprep.subr.mxu0 0.0
    %1940 = vmatpush1.msra.mxu0 0.0
    %1941 = vmatprep.subr.mxu0 0.0
    %1942 = vmatpush1.msra.mxu0 0.0
    %1943 = vmatprep.subr.mxu0 0.0
    %1944 = vmatpush1.msra.mxu0 0.0
    %1945 = vmatprep.subr.mxu0 0.0
    %1946 = vmatpush1.msra.mxu0 0.0
    %1947 = vmatprep.subr.mxu0 0.0
    %1948 = vmatpush1.msra.mxu0 0.0
    %1949 = vmatprep.subr.mxu0 0.0
    %1950 = vmatpush1.msra.mxu0 0.0
    %1951 = vmatprep.subr.mxu0 0.0
    %1952 = vmatpush1.msra.mxu0 0.0
    %1953 = vmatprep.subr.mxu0 0.0
    %1954 = vmatpush1.msra.mxu0 0.0
    %1955 = vmatprep.subr.mxu0 0.0
    %1956 = vmatpush1.msra.mxu0 0.0
    %1957 = vmatprep.subr.mxu0 0.0
    %1958 = vmatpush1.msra.mxu0 0.0
    %1959 = vmatprep.subr.mxu0 0.0
    %1960 = vmatpush1.msra.mxu0 0.0
    %1961 = vmatprep.subr.mxu0 0.0
    %1962 = vmatpush1.msra.mxu0 0.0
    %1963 = vmatprep.subr.mxu0 0.0
    %1964 = vmatpush1.msra.mxu0 0.0
    %1965 = vmatprep.subr.mxu0 0.0
    %1966 = vmatpush1.msra.mxu0 0.0
    %1967 = vmatprep.subr.mxu0 0.0
    %1968 = vmatpush1.msra.mxu0 0.0
    %1969 = vmatprep.subr.mxu0 0.0
    %1970 = vmatpush1.msra.mxu0 0.0
    %1971 = vmatprep.subr.mxu0 0.0
    %1972 = vmatpush1.msra.mxu0 0.0
    %1973 = vmatprep.mubr.f32.mxu0 0.0
    %1974 = vmatmul.mubr.f32.gmra.mrb[0].mxu0 %v1900
    %v1975 = vpop.f32.mrb[0].mxu0
    %v1976 = vadd.f32 %v1897, %v1975
    %v1977 = vpop.f32.mrb[0].mxu0
    %1978 = vmatprep.mubr.f32.mxu0 0.0
    %1979 = vmatmul.mubr.f32.gmra.mrb[0].mxu0 %v1903
    %v1980 = vpop.f32.mrb[0].mxu0
    %v1981 = vadd.f32 %v1897, %v1980
    %v1982 = vpop.f32.mrb[0].mxu0
    %1983 = vdwg.mxu0
    %v1985 = vsel %vm439, %v21, 0
    %v1988 = vsel %vm439, %v22, 0
    %1990 = vmatprep.subr.mxu0 0.0
    %1991 = vmatpush1.msra.mxu0 %v1976
    %1992 = vmatprep.subr.mxu0 0.0
    %1993 = vmatpush1.msra.mxu0 %v1981
    %1994 = vmatprep.subr.mxu0 0.0
    %1995 = vmatpush1.msra.mxu0 0.0
    %1996 = vmatprep.subr.mxu0 0.0
    %1997 = vmatpush1.msra.mxu0 0.0
    %1998 = vmatprep.subr.mxu0 0.0
    %1999 = vmatpush1.msra.mxu0 0.0
    %2000 = vmatprep.subr.mxu0 0.0
    %2001 = vmatpush1.msra.mxu0 0.0
    %2002 = vmatprep.subr.mxu0 0.0
    %2003 = vmatpush1.msra.mxu0 0.0
    %2004 = vmatprep.subr.mxu0 0.0
    %2005 = vmatpush1.msra.mxu0 0.0
    %2006 = vmatprep.subr.mxu0 0.0
    %2007 = vmatpush1.msra.mxu0 0.0
    %2008 = vmatprep.subr.mxu0 0.0
    %2009 = vmatpush1.msra.mxu0 0.0
    %2010 = vmatprep.subr.mxu0 0.0
    %2011 = vmatpush1.msra.mxu0 0.0
    %2012 = vmatprep.subr.mxu0 0.0
    %2013 = vmatpush1.msra.mxu0 0.0
    %2014 = vmatprep.subr.mxu0 0.0
    %2015 = vmatpush1.msra.mxu0 0.0
    %2016 = vmatprep.subr.mxu0 0.0
    %2017 = vmatpush1.msra.mxu0 0.0
    %2018 = vmatprep.subr.mxu0 0.0
    %2019 = vmatpush1.msra.mxu0 0.0
    %2020 = vmatprep.subr.mxu0 0.0
    %2021 = vmatpush1.msra.mxu0 0.0
    %2022 = vmatprep.subr.mxu0 0.0
    %2023 = vmatpush1.msra.mxu0 0.0
    %2024 = vmatprep.subr.mxu0 0.0
    %2025 = vmatpush1.msra.mxu0 0.0
    %2026 = vmatprep.subr.mxu0 0.0
    %2027 = vmatpush1.msra.mxu0 0.0
    %2028 = vmatprep.subr.mxu0 0.0
    %2029 = vmatpush1.msra.mxu0 0.0
    %2030 = vmatprep.subr.mxu0 0.0
    %2031 = vmatpush1.msra.mxu0 0.0
    %2032 = vmatprep.subr.mxu0 0.0
    %2033 = vmatpush1.msra.mxu0 0.0
    %2034 = vmatprep.subr.mxu0 0.0
    %2035 = vmatpush1.msra.mxu0 0.0
    %2036 = vmatprep.subr.mxu0 0.0
    %2037 = vmatpush1.msra.mxu0 0.0
    %2038 = vmatprep.subr.mxu0 0.0
    %2039 = vmatpush1.msra.mxu0 0.0
    %2040 = vmatprep.subr.mxu0 0.0
    %2041 = vmatpush1.msra.mxu0 0.0
    %2042 = vmatprep.subr.mxu0 0.0
    %2043 = vmatpush1.msra.mxu0 0.0
    %2044 = vmatprep.subr.mxu0 0.0
    %2045 = vmatpush1.msra.mxu0 0.0
    %2046 = vmatprep.subr.mxu0 0.0
    %2047 = vmatpush1.msra.mxu0 0.0
    %2048 = vmatprep.subr.mxu0 0.0
    %2049 = vmatpush1.msra.mxu0 0.0
    %2050 = vmatprep.subr.mxu0 0.0
    %2051 = vmatpush1.msra.mxu0 0.0
    %2052 = vmatprep.subr.mxu0 0.0
    %2053 = vmatpush1.msra.mxu0 0.0
    %2054 = vmatprep.mubr.f32.mxu0 0.0
    %2055 = vmatmul.mubr.f32.gmra.mrb[0].mxu0 %v1985
    %v2056 = vpop.f32.mrb[0].mxu0
    %v2057 = vadd.f32 0.0, %v2056
    %v2058 = vpop.f32.mrb[0].mxu0
    %2059 = vmatprep.mubr.f32.mxu0 0.0
    %2060 = vmatmul.mubr.f32.gmra.mrb[0].mxu0 %v1988
    %v2061 = vpop.f32.mrb[0].mxu0
    %v2062 = vadd.f32 0.0, %v2061
    %v2063 = vpop.f32.mrb[0].mxu0
    %2064 = vdwg.mxu0
    %2065 = vst.msk [vmem:[#allocation3] sm:$0xff] %vm439, %v2057
    %2066 = vst.msk [vmem:[#allocation3 + $0x8] sm:$0xff] %vm439, %v2062
    // Predicated region
    $region18: #{enc_mtan_rnn_forward.1} parent=1 // pred_check
      _
    $region19: #{enc_mtan_rnn_forward.1} parent=1 // pred_check_branch
      %2068 = sbr.rel (0) target = $region21
    $region20: #{enc_mtan_rnn_forward.1} parent=1 // pred_region
      %s2070 = ssub.s32 256, 256
      %2071 = vsyncadd [#allocation4], %s2070
      %s2072 = sshll.u32 [#allocation3], 4
      %s2073 = int_to_ptr.vmem [resolvable:$true] %s2072
      %2078 = dma.vmem_to_hbm [thread:$0]  %s2073, 256, %s4, [#allocation4], 128, 128, 8
    $region21: #{enc_mtan_rnn_forward.1} parent=1 // pred_fallthru
      _
    // Predicated region
    $region22: #{enc_mtan_rnn_forward.1} parent=1 // pred_check
      _
    $region23: #{enc_mtan_rnn_forward.1} parent=1 // pred_check_branch
      %2080 = sbr.rel (0) target = $region25
    $region24: #{enc_mtan_rnn_forward.1} parent=1 // pred_region
      %2081 = dma.done [#allocation4], 256
    $region25: #{enc_mtan_rnn_forward.1} parent=1 // pred_fallthru
      _
    %2082 = vsyncpa [#allocation4], 1

</llo_original>
